<compile_context>
chip_gen: v6e
topology: v6e:2x2x1
jax: 0.10.0
libtpu: 0.0.40
codegen_flags: <defaults>
</compile_context>

<pallas_src>
import functools

import jax
import jax.numpy as jnp
from jax import lax
from jax.experimental import pallas as pl
from jax.experimental.pallas import tpu as pltpu

VGG19_CFG = [64, 64, 'M', 128, 128, 'M', 256, 256, 256, 256, 'M',
             512, 512, 512, 512, 'M']


# --------------------------------------------------------------------------
# conv 3x3 (padding=1) + bias + ReLU (+ optional fused 2x2 maxpool),
# one batch element per grid step
# --------------------------------------------------------------------------
def _conv3x3_relu_pool_kernel(x_ref, w_ref, b_ref, o_ref, xcat_ref,
                              *, H, W, Cin, Cout, pool, fold_dy):
    # x_ref:    (H, W, Cin)        bf16 (batch dim squeezed)
    # w_ref:    (1, 9*Cin, Cout)   bf16  if fold_dy  (full im2col weights)
    #           (3, 3*Cin, Cout)   bf16  otherwise   (dx packed into K, per dy)
    # b_ref:    (1, Cout)          f32
    # o_ref:    (Ho, Wo, Cout)     bf16
    # xcat_ref: (H+2, W, 3*Cin)    bf16 scratch: dx-shifted copies packed along
    #                              lanes, zero rows at top/bottom = SAME padding
    xv = x_ref[...]

    # In-kernel SAME padding: zero the scratch once, then write the three
    # dx-shifted views of x into the lane-packed K blocks.  Edge columns that
    # are never written stay zero (left/right padding); rows 0 and H+1 stay
    # zero (top/bottom padding).
    xcat_ref[...] = jnp.zeros_like(xcat_ref)
    xcat_ref[1:H + 1, 1:W, 0:Cin] = xv[:, 0:W - 1, :]            # dx = 0
    xcat_ref[1:H + 1, :, Cin:2 * Cin] = xv                       # dx = 1
    xcat_ref[1:H + 1, 0:W - 1, 2 * Cin:3 * Cin] = xv[:, 1:W, :]  # dx = 2

    if fold_dy:
        # Small-Cin (first) layer: full im2col, single matmul with K = 9*Cin.
        lhs = jnp.concatenate(
            [xcat_ref[dy:dy + H, :, :].reshape(H * W, 3 * Cin)
             for dy in range(3)], axis=-1)                       # (H*W, 9*Cin)
        acc = jnp.dot(lhs, w_ref[0], preferred_element_type=jnp.float32)
    else:
        # Three matmuls with K = 3*Cin (dy slices along the outer dim are free).
        acc = jnp.dot(xcat_ref[0:H, :, :].reshape(H * W, 3 * Cin), w_ref[0],
                      preferred_element_type=jnp.float32)
        for dy in (1, 2):
            acc = acc + jnp.dot(
                xcat_ref[dy:dy + H, :, :].reshape(H * W, 3 * Cin), w_ref[dy],
                preferred_element_type=jnp.float32)

    y = jnp.maximum(acc + b_ref[...], 0.0)            # bias + ReLU in f32
    y = y.reshape(H, W, Cout)

    if pool:
        # fused 2x2 stride-2 maxpool epilogue (on the in-register f32 value)
        yw = jnp.max(y.reshape(H, W // 2, 2, Cout), axis=2)          # W pairs
        yh = jnp.max(yw.reshape(H // 2, 2, W // 2, Cout), axis=1)    # H pairs
        o_ref[...] = yh.astype(o_ref.dtype)
    else:
        o_ref[...] = y.astype(o_ref.dtype)


def conv3x3_relu_pool(x, w_packed, b, *, pool):
    # x: (N, H, W, Cin) bf16
    # w_packed: (1, 9*Cin, Cout) or (3, 3*Cin, Cout) bf16
    # b: (1, Cout) f32
    N, H, W, Cin = x.shape
    Cout = w_packed.shape[-1]
    fold_dy = (w_packed.shape[0] == 1)
    if pool:
        assert H % 2 == 0 and W % 2 == 0, (H, W)
        Ho, Wo = H // 2, W // 2
    else:
        Ho, Wo = H, W

    kernel = functools.partial(_conv3x3_relu_pool_kernel, H=H, W=W, Cin=Cin,
                               Cout=Cout, pool=pool, fold_dy=fold_dy)
    return pl.pallas_call(
        kernel,
        out_shape=jax.ShapeDtypeStruct((N, Ho, Wo, Cout), jnp.bfloat16),
        grid=(N,),
        in_specs=[
            pl.BlockSpec((pl.Squeezed(), H, W, Cin), lambda n: (n, 0, 0, 0)),
            pl.BlockSpec(w_packed.shape, lambda n: (0, 0, 0)),
            pl.BlockSpec((1, Cout), lambda n: (0, 0)),
        ],
        out_specs=pl.BlockSpec((pl.Squeezed(), Ho, Wo, Cout),
                               lambda n: (n, 0, 0, 0)),
        scratch_shapes=[pltpu.VMEM((H + 2, W, 3 * Cin), jnp.bfloat16)],
        compiler_params=pltpu.CompilerParams(
            dimension_semantics=("parallel",),
            vmem_limit_bytes=64 * 1024 * 1024),
    )(x, w_packed, b)


# --------------------------------------------------------------------------
# parameter init (deterministic, synthetic)
# TODO(synk): original module loads torchvision vgg19(pretrained=True)
#             weights; no checkpoint loading here by design.
# --------------------------------------------------------------------------
def init_vgg19_params(key):
    params = []
    cin = 3
    for v in VGG19_CFG:
        if v == 'M':
            continue
        key, kw, kb = jax.random.split(key, 3)
        fan_in = 9 * cin
        w = jax.random.normal(kw, (v, cin, 3, 3), jnp.float32) * jnp.sqrt(2.0 / fan_in)
        b = jax.random.normal(kb, (v,), jnp.float32) * 0.01
        params.append((w, b))       # PyTorch layout: (Cout, Cin, kH, kW), (Cout,)
        cin = v
    return params


def prepare_params(params):
    """One-time packing: transpose to tap-major, fold dx (and dy for the first
    layer) into the matmul K dim, cast weights to bf16, and mark which conv is
    followed by a maxpool (fused into its epilogue)."""
    prepped = []
    conv_idx = 0
    for i, v in enumerate(VGG19_CFG):
        if v == 'M':
            continue
        w, b = params[conv_idx]
        conv_idx += 1
        cout, cin = w.shape[0], w.shape[1]
        wt = jnp.transpose(w, (2, 3, 1, 0))        # (kh, kw, Cin, Cout)
        if 3 * cin < 128:                          # first layer: full im2col K
            wp = wt.reshape(1, 9 * cin, cout)
        else:                                      # dx folded into K, per dy
            wp = wt.reshape(3, 3 * cin, cout)
        wp = wp.astype(jnp.bfloat16)
        bp = b.reshape(1, cout).astype(jnp.float32)
        pool = (i + 1 < len(VGG19_CFG)) and (VGG19_CFG[i + 1] == 'M')
        prepped.append((wp, bp, pool))
    return prepped


# --------------------------------------------------------------------------
# forward pass (== vgg19_perceptual_loss.forward)
# --------------------------------------------------------------------------
def vgg19_perceptual_loss_forward(x_nchw, prepped):
    x = jnp.transpose(x_nchw, (0, 2, 3, 1)).astype(jnp.bfloat16)   # NCHW -> NHWC
    for wp, bp, pool in prepped:
        x = conv3x3_relu_pool(x, wp, bp, pool=pool)
    return jnp.transpose(x, (0, 3, 1, 2)).astype(jnp.float32)      # NHWC -> NCHW


# --------------------------------------------------------------------------
# pure-JAX reference (emulates the same bf16-in / f32-accumulate precision)
# --------------------------------------------------------------------------
def vgg19_ref(x_nchw, params):
    x = x_nchw.astype(jnp.bfloat16)
    idx = 0
    for v in VGG19_CFG:
        if v == 'M':
            N, C, H, W = x.shape
            x = x.reshape(N, C, H // 2, 2, W // 2, 2).max(axis=(3, 5))
        else:
            w, b = params[idx]
            idx += 1
            y = lax.conv_general_dilated(
                x, w.astype(jnp.bfloat16), (1, 1), 'SAME',
                dimension_numbers=('NCHW', 'OIHW', 'NCHW'),
                preferred_element_type=jnp.float32)
            y = jnp.maximum(y + b.reshape(1, -1, 1, 1), 0.0)
            x = y.astype(jnp.bfloat16)
    return x.astype(jnp.float32)


if __name__ == "__main__":
    key = jax.random.PRNGKey(0)
    kx, kp = jax.random.split(key)
    # PyTorch-convention NCHW input, 3 channels (VGG), small spatial size.
    x = jax.random.normal(kx, (2, 3, 16, 16), jnp.float32)
    params = init_vgg19_params(kp)
    prepped = prepare_params(params)

    out = vgg19_perceptual_loss_forward(x, prepped)
    out = jax.block_until_ready(out)

    ref = vgg19_ref(x, params)
    assert out.shape == ref.shape == (2, 512, 1, 1), (out.shape, ref.shape)
    max_err = float(jnp.max(jnp.abs(out - ref)))
    assert jnp.allclose(out, ref, atol=2e-2, rtol=2e-2), max_err

    print("KERNEL_OK")
</pallas_src>

<mosaic_0001>
module attributes {stable_mosaic.version = 11 : i64} {
  func.func @_conv3x3_relu_pool_kernel(%arg0: i32, %arg1: memref<1x16x16x3xbf16, #tpu.memory_space<vmem>>, %arg2: memref<1x27x64xbf16, #tpu.memory_space<vmem>>, %arg3: memref<1x64xf32, #tpu.memory_space<vmem>>, %arg4: memref<1x16x16x64xbf16, #tpu.memory_space<vmem>>, %arg5: memref<18x16x9xbf16, #tpu.memory_space<vmem>>) attributes {dimension_semantics = [#tpu.dimension_semantics<parallel>], iteration_bounds = array<i64: 2>, scalar_prefetch = 0 : i64, scratch_operands = 1 : i64, tpu.core_type = #tpu.core_type<tc>, window_params = [{transform_indices = @transform_0, window_bounds = array<i64: 1, 16, 16, 3>}, {pipeline_mode = #tpu.pipeline_mode<synchronous>, transform_indices = @transform_1, window_bounds = array<i64: 1, 27, 64>}, {pipeline_mode = #tpu.pipeline_mode<synchronous>, transform_indices = @transform_2, window_bounds = array<i64: 1, 64>}, {transform_indices = @transform_3, window_bounds = array<i64: 1, 16, 16, 64>}]} {
    %c0 = arith.constant 0 : index
    %c0_0 = arith.constant 0 : index
    %c0_1 = arith.constant 0 : index
    %c0_2 = arith.constant 0 : index
    %0 = vector.load %arg1[%c0, %c0_0, %c0_1, %c0_2] : memref<1x16x16x3xbf16, #tpu.memory_space<vmem>>, vector<1x16x16x3xbf16>
    %1 = vector.shape_cast %0 : vector<1x16x16x3xbf16> to vector<16x16x3xbf16>
    %cst = arith.constant 0.000000e+00 : bf16
    %2 = vector.broadcast %cst : bf16 to vector<18x16x9xbf16>
    %c0_3 = arith.constant 0 : index
    %c0_4 = arith.constant 0 : index
    %c0_5 = arith.constant 0 : index
    %3 = vector.load %arg5[%c0_3, %c0_4, %c0_5] : memref<18x16x9xbf16, #tpu.memory_space<vmem>>, vector<18x16x9xbf16>
    tpu.vector_store %arg5[%c0_3, %c0_4, %c0_5], %2 {strides = array<i32>} : memref<18x16x9xbf16, #tpu.memory_space<vmem>>, vector<18x16x9xbf16>,
    %4 = vector.extract_strided_slice %1 {offsets = [0, 0, 0], sizes = [16, 15, 3], strides = [1, 1, 1]} : vector<16x16x3xbf16> to vector<16x15x3xbf16>
    %c1 = arith.constant 1 : index
    %c1_6 = arith.constant 1 : index
    %c0_7 = arith.constant 0 : index
    %5 = vector.load %arg5[%c1, %c1_6, %c0_7] : memref<18x16x9xbf16, #tpu.memory_space<vmem>>, vector<16x15x3xbf16>
    tpu.vector_store %arg5[%c1, %c1_6, %c0_7], %4 {strides = array<i32>} : memref<18x16x9xbf16, #tpu.memory_space<vmem>>, vector<16x15x3xbf16>,
    %c1_8 = arith.constant 1 : index
    %c0_9 = arith.constant 0 : index
    %c3 = arith.constant 3 : index
    %6 = vector.load %arg5[%c1_8, %c0_9, %c3] : memref<18x16x9xbf16, #tpu.memory_space<vmem>>, vector<16x16x3xbf16>
    tpu.vector_store %arg5[%c1_8, %c0_9, %c3], %1 {strides = array<i32>} : memref<18x16x9xbf16, #tpu.memory_space<vmem>>, vector<16x16x3xbf16>,
    %7 = vector.extract_strided_slice %1 {offsets = [0, 1, 0], sizes = [16, 15, 3], strides = [1, 1, 1]} : vector<16x16x3xbf16> to vector<16x15x3xbf16>
    %c1_10 = arith.constant 1 : index
    %c0_11 = arith.constant 0 : index
    %c6 = arith.constant 6 : index
    %8 = vector.load %arg5[%c1_10, %c0_11, %c6] : memref<18x16x9xbf16, #tpu.memory_space<vmem>>, vector<16x15x3xbf16>
    tpu.vector_store %arg5[%c1_10, %c0_11, %c6], %7 {strides = array<i32>} : memref<18x16x9xbf16, #tpu.memory_space<vmem>>, vector<16x15x3xbf16>,
    %c0_12 = arith.constant 0 : index
    %c0_13 = arith.constant 0 : index
    %c0_14 = arith.constant 0 : index
    %9 = vector.load %arg5[%c0_12, %c0_13, %c0_14] : memref<18x16x9xbf16, #tpu.memory_space<vmem>>, vector<16x16x9xbf16>
    %10 = vector.shape_cast %9 : vector<16x16x9xbf16> to vector<256x9xbf16>
    %c1_15 = arith.constant 1 : index
    %c0_16 = arith.constant 0 : index
    %c0_17 = arith.constant 0 : index
    %11 = vector.load %arg5[%c1_15, %c0_16, %c0_17] : memref<18x16x9xbf16, #tpu.memory_space<vmem>>, vector<16x16x9xbf16>
    %12 = vector.shape_cast %11 : vector<16x16x9xbf16> to vector<256x9xbf16>
    %c2 = arith.constant 2 : index
    %c0_18 = arith.constant 0 : index
    %c0_19 = arith.constant 0 : index
    %13 = vector.load %arg5[%c2, %c0_18, %c0_19] : memref<18x16x9xbf16, #tpu.memory_space<vmem>>, vector<16x16x9xbf16>
    %14 = vector.shape_cast %13 : vector<16x16x9xbf16> to vector<256x9xbf16>
    %15 = tpu.concatenate %10, %12, %14 in 1 : vector<256x9xbf16>, vector<256x9xbf16>, vector<256x9xbf16> -> vector<256x27xbf16>
    %c0_20 = arith.constant 0 : index
    %c0_21 = arith.constant 0 : index
    %c0_22 = arith.constant 0 : index
    %16 = vector.load %arg2[%c0_20, %c0_21, %c0_22] : memref<1x27x64xbf16, #tpu.memory_space<vmem>>, vector<1x27x64xbf16>
    %17 = vector.shape_cast %16 : vector<1x27x64xbf16> to vector<27x64xbf16>
    %cst_23 = arith.constant dense<0.000000e+00> : vector<256x64xf32>
    %18 = tpu.matmul %15, %17, %cst_23 {dimension_numbers = #tpu.dot_dimension_numbers<[1], [0], [0], [1], [0, 0, 1, 1], [], []>} : vector<256x27xbf16>, vector<27x64xbf16>, vector<256x64xf32> -> vector<256x64xf32>
    %c0_24 = arith.constant 0 : index
    %c0_25 = arith.constant 0 : index
    %19 = vector.load %arg3[%c0_24, %c0_25] : memref<1x64xf32, #tpu.memory_space<vmem>>, vector<1x64xf32>
    %20 = vector.broadcast %19 : vector<1x64xf32> to vector<256x64xf32>
    %21 = arith.addf %18, %20 : vector<256x64xf32>
    %cst_26 = arith.constant 0.000000e+00 : f32
    %22 = vector.broadcast %cst_26 : f32 to vector<256x64xf32>
    %23 = arith.maximumf %21, %22 : vector<256x64xf32>
    %24 = vector.shape_cast %23 : vector<256x64xf32> to vector<16x16x64xf32>
    %25 = arith.truncf %24 : vector<16x16x64xf32> to vector<16x16x64xbf16>
    %c0_27 = arith.constant 0 : index
    %c0_28 = arith.constant 0 : index
    %c0_29 = arith.constant 0 : index
    %c0_30 = arith.constant 0 : index
    %26 = vector.load %arg4[%c0_27, %c0_28, %c0_29, %c0_30] : memref<1x16x16x64xbf16, #tpu.memory_space<vmem>>, vector<1x16x16x64xbf16>
    %27 = vector.shape_cast %26 : vector<1x16x16x64xbf16> to vector<16x16x64xbf16>
    %28 = vector.shape_cast %25 : vector<16x16x64xbf16> to vector<1x16x16x64xbf16>
    tpu.vector_store %arg4[%c0_27, %c0_28, %c0_29, %c0_30], %28 {strides = array<i32>} : memref<1x16x16x64xbf16, #tpu.memory_space<vmem>>, vector<1x16x16x64xbf16>,
    return
  }
  func.func @transform_0(%arg0: i32) -> (i32, i32, i32, i32) {
    %c0_i32 = arith.constant 0 : i32
    %c0_i32_0 = arith.constant 0 : i32
    %c0_i32_1 = arith.constant 0 : i32
    %c0_i32_2 = arith.constant 0 : i32
    return %arg0, %c0_i32, %c0_i32_0, %c0_i32_1 : i32, i32, i32, i32
  }
  func.func @transform_1(%arg0: i32) -> (i32, i32, i32) {
    %c0_i32 = arith.constant 0 : i32
    %c0_i32_0 = arith.constant 0 : i32
    %c0_i32_1 = arith.constant 0 : i32
    %c0_i32_2 = arith.constant 0 : i32
    return %c0_i32, %c0_i32_0, %c0_i32_1 : i32, i32, i32
  }
  func.func @transform_2(%arg0: i32) -> (i32, i32) {
    %c0_i32 = arith.constant 0 : i32
    %c0_i32_0 = arith.constant 0 : i32
    %c0_i32_1 = arith.constant 0 : i32
    return %c0_i32, %c0_i32_0 : i32, i32
  }
  func.func @transform_3(%arg0: i32) -> (i32, i32, i32, i32) {
    %c0_i32 = arith.constant 0 : i32
    %c0_i32_0 = arith.constant 0 : i32
    %c0_i32_1 = arith.constant 0 : i32
    %c0_i32_2 = arith.constant 0 : i32
    return %arg0, %c0_i32, %c0_i32_0, %c0_i32_1 : i32, i32, i32, i32
  }
}

</mosaic_0001>

<llo_original>
// kernel: tpu_custom_call.1
$region0: #{tpu_custom_call.1}
  #allocation0 [shape = 'u32[]', space=smem, size = 0x4, offset = 0x4, fixed_abs, tag = 'smem constant byte address 0x4 - core index']
  #allocation1 [shape = 'u32[144,128]{1,0:T(1,128)}', space=vmem, size = 0x12000, scoped, tag = 'internal scratch']
  #allocation2 [shape = 'bf16[18,16,9]{2,1,0:T(8,128)(2,1)}', space=vmem, size = 0x12000, scoped, tag = 'scratch operand']
  %s0 = inlined_call_operand.vmem [shape: bf16[2,16,16,3], index: 0, kind: input, shape index: {}]
  %s1 = inlined_call_operand.vmem [shape: bf16[1,27,64], index: 1, kind: input, shape index: {}]
  %s2 = inlined_call_operand.vmem [shape: f32[1,64], index: 2, kind: input, shape index: {}]
  %s3 = inlined_call_operand.hbm [shape: bf16[2,16,16,64], index: 3, kind: output, shape index: {}]
  %s4 = sld [smem:[#allocation0]]
  $region45: #{tpu_custom_call.1} parent=0
    _
  %s6 = ssub.s32 1, %s4
  %s7 = scalar_select 0, %s6, %s4
  $region1: #{tpu_custom_call.1} parent=0
    #allocation3 [shape = 'u8[131072]{0}', space=vmem, size = 0x20000, scoped, tag = 'output window, operand 0']
    #allocation4 [shape = 's32[2]{0}', space=sflag, size = 0x8, scoped, tag = 'scoped memory for tpu_custom_call.1']
    %8 = vsyncpa [#allocation4], 0
    %s9 = scalar_lea.sflag [#allocation4], 1
    %10 = vsyncpa %s9, 0
    loop: start=0, step=1, limit=4
    $region2: #{tpu_custom_call.1} parent=1 // loop_pre_header
      _
    $region3: #{tpu_custom_call.1} parent=1 // loop_header
      %s12 = sphi 0, %s16
      %p13 = scmp.ge.s32.totalorder %s12, 4
      %s22 = sphi 0, %s24
      %s25 = sphi 0, %s22
      %s26 = sphi 0, %s25
      %s42 = sphi 0, %s26
      %s46 = sphi 0, %s46
      %s48 = sphi 0, %s46
      %s49 = sphi 0, %s48
      %s63 = sphi 0, %s49
      %s67 = sphi 0, %s67
      %s69 = sphi 0, %s67
      %s70 = sphi 0, %s69
      %s84 = sphi 0, %s70
      %s90 = sphi 0, %s92
      %s93 = sphi 0, %s90
      %s94 = sphi 0, %s93
      %s110 = sphi 0, %s94
    $region4: #{tpu_custom_call.1} parent=1 // loop_header_branch
      %15 = sbr.rel (%p13) target = $region8
    $region5: #{tpu_custom_call.1} parent=1 // loop_body
      %s17 = ssub.s32 %s12, 1
      %s18 = ssub.s32 %s12, 2
      %s19 = sadd.s32 %s12, 1
      %s20 = ssub.s32 %s12, %s19
      %p21 = scmp.eq.s32.totalorder %s20, 0
      %s23 = sadd.s32 %s22, 1
      %s24 = scalar_select %p21, %s22, %s23
      %p27 = pneg %p21
      %p28 = scmp.eq.s32.totalorder %s12, 1
      %p29 = por %p27, %p28
      %p30 = scmp.ne.s32.totalorder %s22, %s25
      %p31 = scmp.eq.s32.totalorder %s12, 0
      %p32 = por %p30, %p31
      %p33 = scmp.ne.s32.totalorder %s22, %s25
      %p34 = scmp.eq.s32.totalorder %s17, 1
      %p35 = por %p33, %p34
      %p36 = scmp.ne.s32.totalorder %s25, %s26
      %p37 = scmp.eq.s32.totalorder %s17, 0
      %p38 = por %p36, %p37
      %p39 = scmp.ne.s32.totalorder %s25, %s26
      %p40 = scmp.eq.s32.totalorder %s18, 1
      %p41 = por %p39, %p40
      %p43 = scmp.ne.s32.totalorder %s26, %s42
      %p44 = scmp.eq.s32.totalorder %s18, 0
      %p45 = por %p43, %p44
      %s47 = sadd.s32 %s46, 1
      %p50 = scmp.eq.s32.totalorder %s12, 1
      %p51 = scmp.ne.s32.totalorder %s46, %s48
      %p52 = scmp.eq.s32.totalorder %s12, 0
      %p53 = por %p51, %p52
      %p54 = scmp.ne.s32.totalorder %s46, %s48
      %p55 = scmp.eq.s32.totalorder %s17, 1
      %p56 = por %p54, %p55
      %p57 = scmp.ne.s32.totalorder %s48, %s49
      %p58 = scmp.eq.s32.totalorder %s17, 0
      %p59 = por %p57, %p58
      %p60 = scmp.ne.s32.totalorder %s48, %s49
      %p61 = scmp.eq.s32.totalorder %s18, 1
      %p62 = por %p60, %p61
      %p64 = scmp.ne.s32.totalorder %s49, %s63
      %p65 = scmp.eq.s32.totalorder %s18, 0
      %p66 = por %p64, %p65
      %s68 = sadd.s32 %s67, 1
      %p71 = scmp.eq.s32.totalorder %s12, 1
      %p72 = scmp.ne.s32.totalorder %s67, %s69
      %p73 = scmp.eq.s32.totalorder %s12, 0
      %p74 = por %p72, %p73
      %p75 = scmp.ne.s32.totalorder %s67, %s69
      %p76 = scmp.eq.s32.totalorder %s17, 1
      %p77 = por %p75, %p76
      %p78 = scmp.ne.s32.totalorder %s69, %s70
      %p79 = scmp.eq.s32.totalorder %s17, 0
      %p80 = por %p78, %p79
      %p81 = scmp.ne.s32.totalorder %s69, %s70
      %p82 = scmp.eq.s32.totalorder %s18, 1
      %p83 = por %p81, %p82
      %p85 = scmp.ne.s32.totalorder %s70, %s84
      %p86 = scmp.eq.s32.totalorder %s18, 0
      %p87 = por %p85, %p86
      %s88 = ssub.s32 %s12, %s19
      %p89 = scmp.eq.s32.totalorder %s88, 0
      %s91 = sadd.s32 %s90, 1
      %s92 = scalar_select %p89, %s90, %s91
      %p95 = pneg %p89
      %p96 = scmp.eq.s32.totalorder %s12, 1
      %p97 = por %p95, %p96
      %p98 = scmp.ne.s32.totalorder %s90, %s93
      %p99 = scmp.eq.s32.totalorder %s12, 0
      %p100 = por %p98, %p99
      %p101 = scmp.ne.s32.totalorder %s90, %s93
      %p102 = scmp.eq.s32.totalorder %s17, 1
      %p103 = por %p101, %p102
      %p104 = scmp.ne.s32.totalorder %s93, %s94
      %p105 = scmp.eq.s32.totalorder %s17, 0
      %p106 = por %p104, %p105
      %p107 = scmp.ne.s32.totalorder %s93, %s94
      %p108 = scmp.eq.s32.totalorder %s18, 1
      %p109 = por %p107, %p108
      %p111 = scmp.ne.s32.totalorder %s94, %s110
      %p112 = scmp.eq.s32.totalorder %s18, 0
      %p113 = por %p111, %p112
      %p114 = scmp.le.s32.totalorder 1, %s12
      %p115 = scmp.lt.s32.totalorder %s12, 3
      %p116 = pnand %p114, %p115
      %p117 = pneg %p116
      // Predicated region
      $region9: #{tpu_custom_call.1} parent=5 // pred_check
        _
      $region10: #{tpu_custom_call.1} parent=5 // pred_check_branch
        %119 = sbr.rel (%p116) target = $region12
      $region11: #{tpu_custom_call.1} parent=5 // pred_region
        %s120 = ssub.s32 %s12, 1
        // Predicated region
        $region13: #{tpu_custom_call.1} parent=11 // pred_check
          %p121 = pneg %p59
        $region14: #{tpu_custom_call.1} parent=11 // pred_check_branch
          %123 = sbr.rel (%p121) target = $region16
        $region15: #{tpu_custom_call.1} parent=11 // pred_region
          _
        $region16: #{tpu_custom_call.1} parent=11 // pred_fallthru
          _
        // Predicated region
        $region17: #{tpu_custom_call.1} parent=11 // pred_check
          %p124 = pneg %p80
        $region18: #{tpu_custom_call.1} parent=11 // pred_check_branch
          %126 = sbr.rel (%p124) target = $region20
        $region19: #{tpu_custom_call.1} parent=11 // pred_region
          _
        $region20: #{tpu_custom_call.1} parent=11 // pred_fallthru
          _
      $region12: #{tpu_custom_call.1} parent=5 // pred_fallthru
        _
      %p127 = scmp.lt.s32.totalorder %s12, 2
      // Predicated region
      $region21: #{tpu_custom_call.1} parent=5 // pred_check
        %p128 = pneg %p127
      $region22: #{tpu_custom_call.1} parent=5 // pred_check_branch
        %130 = sbr.rel (%p128) target = $region24
      $region23: #{tpu_custom_call.1} parent=5 // pred_region
        // Predicated region
        $region25: #{tpu_custom_call.1} parent=23 // pred_check
          %p131 = pneg %p32
        $region26: #{tpu_custom_call.1} parent=23 // pred_check_branch
          %133 = sbr.rel (%p131) target = $region28
        $region27: #{tpu_custom_call.1} parent=23 // pred_region
          %p134 = scmp.lt.s32.totalorder %s12, 1
          %s135 = scalar_select %p134, %s12, 1
          %s136 = smul.addr %s135, 32
          %s137 = smul.addr %s136, 4
          %s138 = scalar_lea.vmem %s0, %s137
        $region28: #{tpu_custom_call.1} parent=23 // pred_fallthru
          _
      $region24: #{tpu_custom_call.1} parent=5 // pred_fallthru
        _
      %p139 = scmp.le.s32.totalorder 1, %s12
      %p140 = scmp.lt.s32.totalorder %s12, 3
      %p141 = pnand %p139, %p140
      %p142 = pneg %p141
      // Predicated region
      $region29: #{tpu_custom_call.1} parent=5 // pred_check
        _
      $region30: #{tpu_custom_call.1} parent=5 // pred_check_branch
        %144 = sbr.rel (%p141) target = $region32
      $region31: #{tpu_custom_call.1} parent=5 // pred_region
        %s145 = ssub.s32 %s12, 1
        %p146 = scmp.lt.s32.totalorder %s17, 1
        %s147 = scalar_select %p146, %s17, 1
        %s148 = smul.addr %s147, 32
        %s149 = smul.addr %s148, 4
        %s150 = scalar_lea.vmem %s0, %s149
        %p151 = pneg %p38
        %p152 = pneg %p35
        %p153 = pneg %p59
        %p154 = pneg %p56
        %p155 = pneg %p80
        %p156 = pneg %p77
        %p157 = pneg %p106
        %p158 = pneg %p103
        %s159 = sand.u32 %s93, 1
        %s160 = scalar_lea.sflag [#allocation4], %s159
        %s161 = sand.u32 %s93, 1
        %s162 = smul.addr %s161, 128
        %s163 = scalar_lea.vmem [#allocation3], %s162
        %p164 = scmp.lt.s32.totalorder %s17, 1
        %s165 = scalar_select %p164, %s17, 1
        %s166 = smul.addr %s165, 32
        %s167 = smul.addr %s166, 4
        %s168 = scalar_lea.vmem %s0, %s167
        %v170 = vld [vmem:[%s168] sm:$0xf]
        %v171 = vld [vmem:[%s168 + $0x4] sm:$0xf]
        %v172 = vld [vmem:[%s168 + $0x8] sm:$0xf]
        %v173 = vld [vmem:[%s168 + $0xc] sm:$0xf]
        %v174 = vld [vmem:[%s168 + $0x10] sm:$0xf]
        %v175 = vld [vmem:[%s168 + $0x14] sm:$0xf]
        %v176 = vld [vmem:[%s168 + $0x18] sm:$0xf]
        %v177 = vld [vmem:[%s168 + $0x1c] sm:$0xf]
        %v178 = vld [vmem:[%s168 + $0x20] sm:$0xf]
        %v179 = vld [vmem:[%s168 + $0x24] sm:$0xf]
        %v180 = vld [vmem:[%s168 + $0x28] sm:$0xf]
        %v181 = vld [vmem:[%s168 + $0x2c] sm:$0xf]
        %v182 = vld [vmem:[%s168 + $0x30] sm:$0xf]
        %v183 = vld [vmem:[%s168 + $0x34] sm:$0xf]
        %v184 = vld [vmem:[%s168 + $0x38] sm:$0xf]
        %v185 = vld [vmem:[%s168 + $0x3c] sm:$0xf]
        %v186 = vld [vmem:[%s168 + $0x40] sm:$0xf]
        %v187 = vld [vmem:[%s168 + $0x44] sm:$0xf]
        %v188 = vld [vmem:[%s168 + $0x48] sm:$0xf]
        %v189 = vld [vmem:[%s168 + $0x4c] sm:$0xf]
        %v190 = vld [vmem:[%s168 + $0x50] sm:$0xf]
        %v191 = vld [vmem:[%s168 + $0x54] sm:$0xf]
        %v192 = vld [vmem:[%s168 + $0x58] sm:$0xf]
        %v193 = vld [vmem:[%s168 + $0x5c] sm:$0xf]
        %v194 = vld [vmem:[%s168 + $0x60] sm:$0xf]
        %v195 = vld [vmem:[%s168 + $0x64] sm:$0xf]
        %v196 = vld [vmem:[%s168 + $0x68] sm:$0xf]
        %v197 = vld [vmem:[%s168 + $0x6c] sm:$0xf]
        %v198 = vld [vmem:[%s168 + $0x70] sm:$0xf]
        %v199 = vld [vmem:[%s168 + $0x74] sm:$0xf]
        %v200 = vld [vmem:[%s168 + $0x78] sm:$0xf]
        %v201 = vld [vmem:[%s168 + $0x7c] sm:$0xf]
        %vm202 = vcmask 68608
        %203 = vst.msk [vmem:[#allocation2] sm:$0xf] %vm202, 0
        %204 = vst.msk [vmem:[#allocation2 + $0x4] sm:$0xf] %vm202, 0
        %205 = vst.msk [vmem:[#allocation2 + $0x8] sm:$0xf] %vm202, 0
        %206 = vst.msk [vmem:[#allocation2 + $0xc] sm:$0xf] %vm202, 0
        %207 = vst.msk [vmem:[#allocation2 + $0x10] sm:$0xf] %vm202, 0
        %208 = vst.msk [vmem:[#allocation2 + $0x14] sm:$0xf] %vm202, 0
        %209 = vst.msk [vmem:[#allocation2 + $0x18] sm:$0xf] %vm202, 0
        %210 = vst.msk [vmem:[#allocation2 + $0x1c] sm:$0xf] %vm202, 0
        %211 = vst.msk [vmem:[#allocation2 + $0x20] sm:$0xf] %vm202, 0
        %212 = vst.msk [vmem:[#allocation2 + $0x24] sm:$0xf] %vm202, 0
        %213 = vst.msk [vmem:[#allocation2 + $0x28] sm:$0xf] %vm202, 0
        %214 = vst.msk [vmem:[#allocation2 + $0x2c] sm:$0xf] %vm202, 0
        %215 = vst.msk [vmem:[#allocation2 + $0x30] sm:$0xf] %vm202, 0
        %216 = vst.msk [vmem:[#allocation2 + $0x34] sm:$0xf] %vm202, 0
        %217 = vst.msk [vmem:[#allocation2 + $0x38] sm:$0xf] %vm202, 0
        %218 = vst.msk [vmem:[#allocation2 + $0x3c] sm:$0xf] %vm202, 0
        %219 = vst.msk [vmem:[#allocation2 + $0x40] sm:$0xf] %vm202, 0
        %220 = vst.msk [vmem:[#allocation2 + $0x44] sm:$0xf] %vm202, 0
        %221 = vst.msk [vmem:[#allocation2 + $0x48] sm:$0xf] %vm202, 0
        %222 = vst.msk [vmem:[#allocation2 + $0x4c] sm:$0xf] %vm202, 0
        %223 = vst.msk [vmem:[#allocation2 + $0x50] sm:$0xf] %vm202, 0
        %224 = vst.msk [vmem:[#allocation2 + $0x54] sm:$0xf] %vm202, 0
        %225 = vst.msk [vmem:[#allocation2 + $0x58] sm:$0xf] %vm202, 0
        %226 = vst.msk [vmem:[#allocation2 + $0x5c] sm:$0xf] %vm202, 0
        %227 = vst.msk [vmem:[#allocation2 + $0x60] sm:$0xf] %vm202, 0
        %228 = vst.msk [vmem:[#allocation2 + $0x64] sm:$0xf] %vm202, 0
        %229 = vst.msk [vmem:[#allocation2 + $0x68] sm:$0xf] %vm202, 0
        %230 = vst.msk [vmem:[#allocation2 + $0x6c] sm:$0xf] %vm202, 0
        %231 = vst.msk [vmem:[#allocation2 + $0x70] sm:$0xf] %vm202, 0
        %232 = vst.msk [vmem:[#allocation2 + $0x74] sm:$0xf] %vm202, 0
        %233 = vst.msk [vmem:[#allocation2 + $0x78] sm:$0xf] %vm202, 0
        %234 = vst.msk [vmem:[#allocation2 + $0x7c] sm:$0xf] %vm202, 0
        %235 = vst.msk [vmem:[#allocation2 + $0x80] sm:$0xf] %vm202, 0
        %236 = vst.msk [vmem:[#allocation2 + $0x84] sm:$0xf] %vm202, 0
        %237 = vst.msk [vmem:[#allocation2 + $0x88] sm:$0xf] %vm202, 0
        %238 = vst.msk [vmem:[#allocation2 + $0x8c] sm:$0xf] %vm202, 0
        %vm239 = vsmask.f32 256
        %vm240 = vsmask.f32 4368
        %vm241 = vmor %vm239, %vm240
        %v243 = vshrl.u32 %v170, 16
        %v245 = vrot.slane %v243, 7
        %v246 = vshll.u32 %v170, 16
        %v248 = vor.u32 %v245, %v246
        %v249 = vrot.slane %v245, 4
        %v251 = vshrl.u32 %v171, 16
        %v253 = vrot.slane %v251, 7
        %v254 = vshll.u32 %v171, 16
        %v256 = vor.u32 %v253, %v254
        %v257 = vsel %vm241, %v249, %v256
        %v259 = vshrl.u32 %v172, 16
        %v261 = vrot.slane %v259, 7
        %v262 = vshll.u32 %v172, 16
        %v264 = vor.u32 %v261, %v262
        %v265 = vrot.slane %v261, 4
        %v267 = vshrl.u32 %v173, 16
        %v269 = vrot.slane %v267, 7
        %v270 = vshll.u32 %v173, 16
        %v272 = vor.u32 %v269, %v270
        %v273 = vsel %vm241, %v265, %v272
        %v275 = vshrl.u32 %v174, 16
        %v277 = vrot.slane %v275, 7
        %v278 = vshll.u32 %v174, 16
        %v280 = vor.u32 %v277, %v278
        %v281 = vrot.slane %v277, 4
        %v283 = vshrl.u32 %v175, 16
        %v285 = vrot.slane %v283, 7
        %v286 = vshll.u32 %v175, 16
        %v288 = vor.u32 %v285, %v286
        %v289 = vsel %vm241, %v281, %v288
        %v291 = vshrl.u32 %v176, 16
        %v293 = vrot.slane %v291, 7
        %v294 = vshll.u32 %v176, 16
        %v296 = vor.u32 %v293, %v294
        %v297 = vrot.slane %v293, 4
        %v299 = vshrl.u32 %v177, 16
        %v301 = vrot.slane %v299, 7
        %v302 = vshll.u32 %v177, 16
        %v304 = vor.u32 %v301, %v302
        %v305 = vsel %vm241, %v297, %v304
        %v307 = vshrl.u32 %v178, 16
        %v309 = vrot.slane %v307, 7
        %v310 = vshll.u32 %v178, 16
        %v312 = vor.u32 %v309, %v310
        %v313 = vrot.slane %v309, 4
        %v315 = vshrl.u32 %v179, 16
        %v317 = vrot.slane %v315, 7
        %v318 = vshll.u32 %v179, 16
        %v320 = vor.u32 %v317, %v318
        %v321 = vsel %vm241, %v313, %v320
        %v323 = vshrl.u32 %v180, 16
        %v325 = vrot.slane %v323, 7
        %v326 = vshll.u32 %v180, 16
        %v328 = vor.u32 %v325, %v326
        %v329 = vrot.slane %v325, 4
        %v331 = vshrl.u32 %v181, 16
        %v333 = vrot.slane %v331, 7
        %v334 = vshll.u32 %v181, 16
        %v336 = vor.u32 %v333, %v334
        %v337 = vsel %vm241, %v329, %v336
        %v339 = vshrl.u32 %v182, 16
        %v341 = vrot.slane %v339, 7
        %v342 = vshll.u32 %v182, 16
        %v344 = vor.u32 %v341, %v342
        %v345 = vrot.slane %v341, 4
        %v347 = vshrl.u32 %v183, 16
        %v349 = vrot.slane %v347, 7
        %v350 = vshll.u32 %v183, 16
        %v352 = vor.u32 %v349, %v350
        %v353 = vsel %vm241, %v345, %v352
        %v355 = vshrl.u32 %v184, 16
        %v357 = vrot.slane %v355, 7
        %v358 = vshll.u32 %v184, 16
        %v360 = vor.u32 %v357, %v358
        %v361 = vrot.slane %v357, 4
        %v363 = vshrl.u32 %v185, 16
        %v365 = vrot.slane %v363, 7
        %v366 = vshll.u32 %v185, 16
        %v368 = vor.u32 %v365, %v366
        %v369 = vsel %vm241, %v361, %v368
        %v371 = vshrl.u32 %v186, 16
        %v373 = vrot.slane %v371, 7
        %v374 = vshll.u32 %v186, 16
        %v376 = vor.u32 %v373, %v374
        %v377 = vrot.slane %v373, 4
        %v379 = vshrl.u32 %v187, 16
        %v381 = vrot.slane %v379, 7
        %v382 = vshll.u32 %v187, 16
        %v384 = vor.u32 %v381, %v382
        %v385 = vsel %vm241, %v377, %v384
        %v387 = vshrl.u32 %v188, 16
        %v389 = vrot.slane %v387, 7
        %v390 = vshll.u32 %v188, 16
        %v392 = vor.u32 %v389, %v390
        %v393 = vrot.slane %v389, 4
        %v395 = vshrl.u32 %v189, 16
        %v397 = vrot.slane %v395, 7
        %v398 = vshll.u32 %v189, 16
        %v400 = vor.u32 %v397, %v398
        %v401 = vsel %vm241, %v393, %v400
        %v403 = vshrl.u32 %v190, 16
        %v405 = vrot.slane %v403, 7
        %v406 = vshll.u32 %v190, 16
        %v408 = vor.u32 %v405, %v406
        %v409 = vrot.slane %v405, 4
        %v411 = vshrl.u32 %v191, 16
        %v413 = vrot.slane %v411, 7
        %v414 = vshll.u32 %v191, 16
        %v416 = vor.u32 %v413, %v414
        %v417 = vsel %vm241, %v409, %v416
        %v419 = vshrl.u32 %v192, 16
        %v421 = vrot.slane %v419, 7
        %v422 = vshll.u32 %v192, 16
        %v424 = vor.u32 %v421, %v422
        %v425 = vrot.slane %v421, 4
        %v427 = vshrl.u32 %v193, 16
        %v429 = vrot.slane %v427, 7
        %v430 = vshll.u32 %v193, 16
        %v432 = vor.u32 %v429, %v430
        %v433 = vsel %vm241, %v425, %v432
        %v435 = vshrl.u32 %v194, 16
        %v437 = vrot.slane %v435, 7
        %v438 = vshll.u32 %v194, 16
        %v440 = vor.u32 %v437, %v438
        %v441 = vrot.slane %v437, 4
        %v443 = vshrl.u32 %v195, 16
        %v445 = vrot.slane %v443, 7
        %v446 = vshll.u32 %v195, 16
        %v448 = vor.u32 %v445, %v446
        %v449 = vsel %vm241, %v441, %v448
        %v451 = vshrl.u32 %v196, 16
        %v453 = vrot.slane %v451, 7
        %v454 = vshll.u32 %v196, 16
        %v456 = vor.u32 %v453, %v454
        %v457 = vrot.slane %v453, 4
        %v459 = vshrl.u32 %v197, 16
        %v461 = vrot.slane %v459, 7
        %v462 = vshll.u32 %v197, 16
        %v464 = vor.u32 %v461, %v462
        %v465 = vsel %vm241, %v457, %v464
        %v467 = vshrl.u32 %v198, 16
        %v469 = vrot.slane %v467, 7
        %v470 = vshll.u32 %v198, 16
        %v472 = vor.u32 %v469, %v470
        %v473 = vrot.slane %v469, 4
        %v475 = vshrl.u32 %v199, 16
        %v477 = vrot.slane %v475, 7
        %v478 = vshll.u32 %v199, 16
        %v480 = vor.u32 %v477, %v478
        %v481 = vsel %vm241, %v473, %v480
        %v483 = vshrl.u32 %v200, 16
        %v485 = vrot.slane %v483, 7
        %v486 = vshll.u32 %v200, 16
        %v488 = vor.u32 %v485, %v486
        %v489 = vrot.slane %v485, 4
        %v491 = vshrl.u32 %v201, 16
        %v493 = vrot.slane %v491, 7
        %v494 = vshll.u32 %v201, 16
        %v496 = vor.u32 %v493, %v494
        %v497 = vsel %vm241, %v489, %v496
        %s530 = scalar_lea.vmem [#allocation2], 8
        %vm531 = vcmask 19456
        %vm532 = vsmask.f32 7938
        %vm533 = vmand %vm531, %vm532
        %v534 = vld [vmem:[%s530] sm:$0xf]
        %v535 = vsel %vm533, %v248, %v534
        %536 = vst [vmem:[%s530] sm:$0xf] %v535
        %vm537 = vcmask 19456
        %538 = vst.msk [vmem:[%s530 + $0x4] sm:$0xf] %vm537, %v257
        %v539 = vld [vmem:[%s530 + $0x8] sm:$0xf]
        %v540 = vsel %vm533, %v264, %v539
        %541 = vst [vmem:[%s530 + $0x8] sm:$0xf] %v540
        %542 = vst.msk [vmem:[%s530 + $0xc] sm:$0xf] %vm537, %v273
        %v543 = vld [vmem:[%s530 + $0x10] sm:$0xf]
        %v544 = vsel %vm533, %v280, %v543
        %545 = vst [vmem:[%s530 + $0x10] sm:$0xf] %v544
        %546 = vst.msk [vmem:[%s530 + $0x14] sm:$0xf] %vm537, %v289
        %v547 = vld [vmem:[%s530 + $0x18] sm:$0xf]
        %v548 = vsel %vm533, %v296, %v547
        %549 = vst [vmem:[%s530 + $0x18] sm:$0xf] %v548
        %550 = vst.msk [vmem:[%s530 + $0x1c] sm:$0xf] %vm537, %v305
        %v551 = vld [vmem:[%s530 + $0x20] sm:$0xf]
        %v552 = vsel %vm533, %v312, %v551
        %553 = vst [vmem:[%s530 + $0x20] sm:$0xf] %v552
        %554 = vst.msk [vmem:[%s530 + $0x24] sm:$0xf] %vm537, %v321
        %v555 = vld [vmem:[%s530 + $0x28] sm:$0xf]
        %v556 = vsel %vm533, %v328, %v555
        %557 = vst [vmem:[%s530 + $0x28] sm:$0xf] %v556
        %558 = vst.msk [vmem:[%s530 + $0x2c] sm:$0xf] %vm537, %v337
        %v559 = vld [vmem:[%s530 + $0x30] sm:$0xf]
        %v560 = vsel %vm533, %v344, %v559
        %561 = vst [vmem:[%s530 + $0x30] sm:$0xf] %v560
        %562 = vst.msk [vmem:[%s530 + $0x34] sm:$0xf] %vm537, %v353
        %v563 = vld [vmem:[%s530 + $0x38] sm:$0xf]
        %v564 = vsel %vm533, %v360, %v563
        %565 = vst [vmem:[%s530 + $0x38] sm:$0xf] %v564
        %566 = vst.msk [vmem:[%s530 + $0x3c] sm:$0xf] %vm537, %v369
        %v567 = vld [vmem:[%s530 + $0x40] sm:$0xf]
        %v568 = vsel %vm533, %v376, %v567
        %569 = vst [vmem:[%s530 + $0x40] sm:$0xf] %v568
        %570 = vst.msk [vmem:[%s530 + $0x44] sm:$0xf] %vm537, %v385
        %v571 = vld [vmem:[%s530 + $0x48] sm:$0xf]
        %v572 = vsel %vm533, %v392, %v571
        %573 = vst [vmem:[%s530 + $0x48] sm:$0xf] %v572
        %574 = vst.msk [vmem:[%s530 + $0x4c] sm:$0xf] %vm537, %v401
        %v575 = vld [vmem:[%s530 + $0x50] sm:$0xf]
        %v576 = vsel %vm533, %v408, %v575
        %577 = vst [vmem:[%s530 + $0x50] sm:$0xf] %v576
        %578 = vst.msk [vmem:[%s530 + $0x54] sm:$0xf] %vm537, %v417
        %v579 = vld [vmem:[%s530 + $0x58] sm:$0xf]
        %v580 = vsel %vm533, %v424, %v579
        %581 = vst [vmem:[%s530 + $0x58] sm:$0xf] %v580
        %582 = vst.msk [vmem:[%s530 + $0x5c] sm:$0xf] %vm537, %v433
        %v583 = vld [vmem:[%s530 + $0x60] sm:$0xf]
        %v584 = vsel %vm533, %v440, %v583
        %585 = vst [vmem:[%s530 + $0x60] sm:$0xf] %v584
        %586 = vst.msk [vmem:[%s530 + $0x64] sm:$0xf] %vm537, %v449
        %v587 = vld [vmem:[%s530 + $0x68] sm:$0xf]
        %v588 = vsel %vm533, %v456, %v587
        %589 = vst [vmem:[%s530 + $0x68] sm:$0xf] %v588
        %590 = vst.msk [vmem:[%s530 + $0x6c] sm:$0xf] %vm537, %v465
        %v591 = vld [vmem:[%s530 + $0x70] sm:$0xf]
        %v592 = vsel %vm533, %v472, %v591
        %593 = vst [vmem:[%s530 + $0x70] sm:$0xf] %v592
        %594 = vst.msk [vmem:[%s530 + $0x74] sm:$0xf] %vm537, %v481
        %v595 = vld [vmem:[%s530 + $0x78] sm:$0xf]
        %v596 = vsel %vm533, %v488, %v595
        %597 = vst [vmem:[%s530 + $0x78] sm:$0xf] %v596
        %598 = vst.msk [vmem:[%s530 + $0x7c] sm:$0xf] %vm537, %v497
        %631 = vrot.lane.b32.xlu0 %v170, 3
        %v632 = vpop.permute.xlu0 %631
        %633 = vrot.lane.b32.xlu0 %v171, 3
        %v634 = vpop.permute.xlu0 %633
        %635 = vrot.lane.b32.xlu0 %v172, 3
        %v636 = vpop.permute.xlu0 %635
        %637 = vrot.lane.b32.xlu0 %v173, 3
        %v638 = vpop.permute.xlu0 %637
        %639 = vrot.lane.b32.xlu0 %v174, 3
        %v640 = vpop.permute.xlu0 %639
        %641 = vrot.lane.b32.xlu0 %v175, 3
        %v642 = vpop.permute.xlu0 %641
        %643 = vrot.lane.b32.xlu0 %v176, 3
        %v644 = vpop.permute.xlu0 %643
        %645 = vrot.lane.b32.xlu0 %v177, 3
        %v646 = vpop.permute.xlu0 %645
        %647 = vrot.lane.b32.xlu0 %v178, 3
        %v648 = vpop.permute.xlu0 %647
        %649 = vrot.lane.b32.xlu0 %v179, 3
        %v650 = vpop.permute.xlu0 %649
        %651 = vrot.lane.b32.xlu0 %v180, 3
        %v652 = vpop.permute.xlu0 %651
        %653 = vrot.lane.b32.xlu0 %v181, 3
        %v654 = vpop.permute.xlu0 %653
        %655 = vrot.lane.b32.xlu0 %v182, 3
        %v656 = vpop.permute.xlu0 %655
        %657 = vrot.lane.b32.xlu0 %v183, 3
        %v658 = vpop.permute.xlu0 %657
        %659 = vrot.lane.b32.xlu0 %v184, 3
        %v660 = vpop.permute.xlu0 %659
        %661 = vrot.lane.b32.xlu0 %v185, 3
        %v662 = vpop.permute.xlu0 %661
        %663 = vrot.lane.b32.xlu0 %v186, 3
        %v664 = vpop.permute.xlu0 %663
        %665 = vrot.lane.b32.xlu0 %v187, 3
        %v666 = vpop.permute.xlu0 %665
        %667 = vrot.lane.b32.xlu0 %v188, 3
        %v668 = vpop.permute.xlu0 %667
        %669 = vrot.lane.b32.xlu0 %v189, 3
        %v670 = vpop.permute.xlu0 %669
        %671 = vrot.lane.b32.xlu0 %v190, 3
        %v672 = vpop.permute.xlu0 %671
        %673 = vrot.lane.b32.xlu0 %v191, 3
        %v674 = vpop.permute.xlu0 %673
        %675 = vrot.lane.b32.xlu0 %v192, 3
        %v676 = vpop.permute.xlu0 %675
        %677 = vrot.lane.b32.xlu0 %v193, 3
        %v678 = vpop.permute.xlu0 %677
        %679 = vrot.lane.b32.xlu0 %v194, 3
        %v680 = vpop.permute.xlu0 %679
        %681 = vrot.lane.b32.xlu0 %v195, 3
        %v682 = vpop.permute.xlu0 %681
        %683 = vrot.lane.b32.xlu0 %v196, 3
        %v684 = vpop.permute.xlu0 %683
        %685 = vrot.lane.b32.xlu0 %v197, 3
        %v686 = vpop.permute.xlu0 %685
        %687 = vrot.lane.b32.xlu0 %v198, 3
        %v688 = vpop.permute.xlu0 %687
        %689 = vrot.lane.b32.xlu0 %v199, 3
        %v690 = vpop.permute.xlu0 %689
        %691 = vrot.lane.b32.xlu0 %v200, 3
        %v692 = vpop.permute.xlu0 %691
        %693 = vrot.lane.b32.xlu0 %v201, 3
        %v694 = vpop.permute.xlu0 %693
        %vm727 = vcmask 44056
        %728 = vst.msk [vmem:[%s530] sm:$0xf] %vm727, %v632
        %729 = vst.msk [vmem:[%s530 + $0x4] sm:$0xf] %vm727, %v634
        %730 = vst.msk [vmem:[%s530 + $0x8] sm:$0xf] %vm727, %v636
        %731 = vst.msk [vmem:[%s530 + $0xc] sm:$0xf] %vm727, %v638
        %732 = vst.msk [vmem:[%s530 + $0x10] sm:$0xf] %vm727, %v640
        %733 = vst.msk [vmem:[%s530 + $0x14] sm:$0xf] %vm727, %v642
        %734 = vst.msk [vmem:[%s530 + $0x18] sm:$0xf] %vm727, %v644
        %735 = vst.msk [vmem:[%s530 + $0x1c] sm:$0xf] %vm727, %v646
        %736 = vst.msk [vmem:[%s530 + $0x20] sm:$0xf] %vm727, %v648
        %737 = vst.msk [vmem:[%s530 + $0x24] sm:$0xf] %vm727, %v650
        %738 = vst.msk [vmem:[%s530 + $0x28] sm:$0xf] %vm727, %v652
        %739 = vst.msk [vmem:[%s530 + $0x2c] sm:$0xf] %vm727, %v654
        %740 = vst.msk [vmem:[%s530 + $0x30] sm:$0xf] %vm727, %v656
        %741 = vst.msk [vmem:[%s530 + $0x34] sm:$0xf] %vm727, %v658
        %742 = vst.msk [vmem:[%s530 + $0x38] sm:$0xf] %vm727, %v660
        %743 = vst.msk [vmem:[%s530 + $0x3c] sm:$0xf] %vm727, %v662
        %744 = vst.msk [vmem:[%s530 + $0x40] sm:$0xf] %vm727, %v664
        %745 = vst.msk [vmem:[%s530 + $0x44] sm:$0xf] %vm727, %v666
        %746 = vst.msk [vmem:[%s530 + $0x48] sm:$0xf] %vm727, %v668
        %747 = vst.msk [vmem:[%s530 + $0x4c] sm:$0xf] %vm727, %v670
        %748 = vst.msk [vmem:[%s530 + $0x50] sm:$0xf] %vm727, %v672
        %749 = vst.msk [vmem:[%s530 + $0x54] sm:$0xf] %vm727, %v674
        %750 = vst.msk [vmem:[%s530 + $0x58] sm:$0xf] %vm727, %v676
        %751 = vst.msk [vmem:[%s530 + $0x5c] sm:$0xf] %vm727, %v678
        %752 = vst.msk [vmem:[%s530 + $0x60] sm:$0xf] %vm727, %v680
        %753 = vst.msk [vmem:[%s530 + $0x64] sm:$0xf] %vm727, %v682
        %754 = vst.msk [vmem:[%s530 + $0x68] sm:$0xf] %vm727, %v684
        %755 = vst.msk [vmem:[%s530 + $0x6c] sm:$0xf] %vm727, %v686
        %756 = vst.msk [vmem:[%s530 + $0x70] sm:$0xf] %vm727, %v688
        %757 = vst.msk [vmem:[%s530 + $0x74] sm:$0xf] %vm727, %v690
        %758 = vst.msk [vmem:[%s530 + $0x78] sm:$0xf] %vm727, %v692
        %759 = vst.msk [vmem:[%s530 + $0x7c] sm:$0xf] %vm727, %v694
        %vm760 = vsmask.f32 3328
        %vm761 = vsmask.f32 7440
        %vm762 = vmor %vm760, %vm761
        %v763 = vrot.slane %v243, 4
        %v764 = vrot.slane %v246, 5
        %v765 = vor.u32 %v763, %v764
        %v766 = vrot.slane %v765, 4
        %v767 = vrot.slane %v254, 5
        %v768 = vsel %vm762, %v766, %v767
        %v769 = vrot.slane %v251, 4
        %v770 = vor.u32 %v769, %v767
        %v771 = vrot.slane %v770, 4
        %v772 = vrot.slane %v259, 4
        %v773 = vrot.slane %v262, 5
        %v774 = vor.u32 %v772, %v773
        %v775 = vrot.slane %v774, 4
        %v776 = vrot.slane %v270, 5
        %v777 = vsel %vm762, %v775, %v776
        %v778 = vrot.slane %v267, 4
        %v779 = vor.u32 %v778, %v776
        %v780 = vrot.slane %v779, 4
        %v781 = vrot.slane %v275, 4
        %v782 = vrot.slane %v278, 5
        %v783 = vor.u32 %v781, %v782
        %v784 = vrot.slane %v783, 4
        %v785 = vrot.slane %v286, 5
        %v786 = vsel %vm762, %v784, %v785
        %v787 = vrot.slane %v283, 4
        %v788 = vor.u32 %v787, %v785
        %v789 = vrot.slane %v788, 4
        %v790 = vrot.slane %v291, 4
        %v791 = vrot.slane %v294, 5
        %v792 = vor.u32 %v790, %v791
        %v793 = vrot.slane %v792, 4
        %v794 = vrot.slane %v302, 5
        %v795 = vsel %vm762, %v793, %v794
        %v796 = vrot.slane %v299, 4
        %v797 = vor.u32 %v796, %v794
        %v798 = vrot.slane %v797, 4
        %v799 = vrot.slane %v307, 4
        %v800 = vrot.slane %v310, 5
        %v801 = vor.u32 %v799, %v800
        %v802 = vrot.slane %v801, 4
        %v803 = vrot.slane %v318, 5
        %v804 = vsel %vm762, %v802, %v803
        %v805 = vrot.slane %v315, 4
        %v806 = vor.u32 %v805, %v803
        %v807 = vrot.slane %v806, 4
        %v808 = vrot.slane %v323, 4
        %v809 = vrot.slane %v326, 5
        %v810 = vor.u32 %v808, %v809
        %v811 = vrot.slane %v810, 4
        %v812 = vrot.slane %v334, 5
        %v813 = vsel %vm762, %v811, %v812
        %v814 = vrot.slane %v331, 4
        %v815 = vor.u32 %v814, %v812
        %v816 = vrot.slane %v815, 4
        %v817 = vrot.slane %v339, 4
        %v818 = vrot.slane %v342, 5
        %v819 = vor.u32 %v817, %v818
        %v820 = vrot.slane %v819, 4
        %v821 = vrot.slane %v350, 5
        %v822 = vsel %vm762, %v820, %v821
        %v823 = vrot.slane %v347, 4
        %v824 = vor.u32 %v823, %v821
        %v825 = vrot.slane %v824, 4
        %v826 = vrot.slane %v355, 4
        %v827 = vrot.slane %v358, 5
        %v828 = vor.u32 %v826, %v827
        %v829 = vrot.slane %v828, 4
        %v830 = vrot.slane %v366, 5
        %v831 = vsel %vm762, %v829, %v830
        %v832 = vrot.slane %v363, 4
        %v833 = vor.u32 %v832, %v830
        %v834 = vrot.slane %v833, 4
        %v835 = vrot.slane %v371, 4
        %v836 = vrot.slane %v374, 5
        %v837 = vor.u32 %v835, %v836
        %v838 = vrot.slane %v837, 4
        %v839 = vrot.slane %v382, 5
        %v840 = vsel %vm762, %v838, %v839
        %v841 = vrot.slane %v379, 4
        %v842 = vor.u32 %v841, %v839
        %v843 = vrot.slane %v842, 4
        %v844 = vrot.slane %v387, 4
        %v845 = vrot.slane %v390, 5
        %v846 = vor.u32 %v844, %v845
        %v847 = vrot.slane %v846, 4
        %v848 = vrot.slane %v398, 5
        %v849 = vsel %vm762, %v847, %v848
        %v850 = vrot.slane %v395, 4
        %v851 = vor.u32 %v850, %v848
        %v852 = vrot.slane %v851, 4
        %v853 = vrot.slane %v403, 4
        %v854 = vrot.slane %v406, 5
        %v855 = vor.u32 %v853, %v854
        %v856 = vrot.slane %v855, 4
        %v857 = vrot.slane %v414, 5
        %v858 = vsel %vm762, %v856, %v857
        %v859 = vrot.slane %v411, 4
        %v860 = vor.u32 %v859, %v857
        %v861 = vrot.slane %v860, 4
        %v862 = vrot.slane %v419, 4
        %v863 = vrot.slane %v422, 5
        %v864 = vor.u32 %v862, %v863
        %v865 = vrot.slane %v864, 4
        %v866 = vrot.slane %v430, 5
        %v867 = vsel %vm762, %v865, %v866
        %v868 = vrot.slane %v427, 4
        %v869 = vor.u32 %v868, %v866
        %v870 = vrot.slane %v869, 4
        %v871 = vrot.slane %v435, 4
        %v872 = vrot.slane %v438, 5
        %v873 = vor.u32 %v871, %v872
        %v874 = vrot.slane %v873, 4
        %v875 = vrot.slane %v446, 5
        %v876 = vsel %vm762, %v874, %v875
        %v877 = vrot.slane %v443, 4
        %v878 = vor.u32 %v877, %v875
        %v879 = vrot.slane %v878, 4
        %v880 = vrot.slane %v451, 4
        %v881 = vrot.slane %v454, 5
        %v882 = vor.u32 %v880, %v881
        %v883 = vrot.slane %v882, 4
        %v884 = vrot.slane %v462, 5
        %v885 = vsel %vm762, %v883, %v884
        %v886 = vrot.slane %v459, 4
        %v887 = vor.u32 %v886, %v884
        %v888 = vrot.slane %v887, 4
        %v889 = vrot.slane %v467, 4
        %v890 = vrot.slane %v470, 5
        %v891 = vor.u32 %v889, %v890
        %v892 = vrot.slane %v891, 4
        %v893 = vrot.slane %v478, 5
        %v894 = vsel %vm762, %v892, %v893
        %v895 = vrot.slane %v475, 4
        %v896 = vor.u32 %v895, %v893
        %v897 = vrot.slane %v896, 4
        %v898 = vrot.slane %v483, 4
        %v899 = vrot.slane %v486, 5
        %v900 = vor.u32 %v898, %v899
        %v901 = vrot.slane %v900, 4
        %v902 = vrot.slane %v494, 5
        %v903 = vsel %vm762, %v901, %v902
        %v904 = vrot.slane %v491, 4
        %v905 = vor.u32 %v904, %v902
        %v906 = vrot.slane %v905, 4
        %907 = vrot.lane.b32.xlu0 %v768, 6
        %v908 = vpop.permute.xlu0 %907
        %909 = vrot.lane.b32.xlu0 %v771, 6
        %v910 = vpop.permute.xlu0 %909
        %911 = vrot.lane.b32.xlu0 %v777, 6
        %v912 = vpop.permute.xlu0 %911
        %913 = vrot.lane.b32.xlu0 %v780, 6
        %v914 = vpop.permute.xlu0 %913
        %915 = vrot.lane.b32.xlu0 %v786, 6
        %v916 = vpop.permute.xlu0 %915
        %917 = vrot.lane.b32.xlu0 %v789, 6
        %v918 = vpop.permute.xlu0 %917
        %919 = vrot.lane.b32.xlu0 %v795, 6
        %v920 = vpop.permute.xlu0 %919
        %921 = vrot.lane.b32.xlu0 %v798, 6
        %v922 = vpop.permute.xlu0 %921
        %923 = vrot.lane.b32.xlu0 %v804, 6
        %v924 = vpop.permute.xlu0 %923
        %925 = vrot.lane.b32.xlu0 %v807, 6
        %v926 = vpop.permute.xlu0 %925
        %927 = vrot.lane.b32.xlu0 %v813, 6
        %v928 = vpop.permute.xlu0 %927
        %929 = vrot.lane.b32.xlu0 %v816, 6
        %v930 = vpop.permute.xlu0 %929
        %931 = vrot.lane.b32.xlu0 %v822, 6
        %v932 = vpop.permute.xlu0 %931
        %933 = vrot.lane.b32.xlu0 %v825, 6
        %v934 = vpop.permute.xlu0 %933
        %935 = vrot.lane.b32.xlu0 %v831, 6
        %v936 = vpop.permute.xlu0 %935
        %937 = vrot.lane.b32.xlu0 %v834, 6
        %v938 = vpop.permute.xlu0 %937
        %939 = vrot.lane.b32.xlu0 %v840, 6
        %v940 = vpop.permute.xlu0 %939
        %941 = vrot.lane.b32.xlu0 %v843, 6
        %v942 = vpop.permute.xlu0 %941
        %943 = vrot.lane.b32.xlu0 %v849, 6
        %v944 = vpop.permute.xlu0 %943
        %945 = vrot.lane.b32.xlu0 %v852, 6
        %v946 = vpop.permute.xlu0 %945
        %947 = vrot.lane.b32.xlu0 %v858, 6
        %v948 = vpop.permute.xlu0 %947
        %949 = vrot.lane.b32.xlu0 %v861, 6
        %v950 = vpop.permute.xlu0 %949
        %951 = vrot.lane.b32.xlu0 %v867, 6
        %v952 = vpop.permute.xlu0 %951
        %953 = vrot.lane.b32.xlu0 %v870, 6
        %v954 = vpop.permute.xlu0 %953
        %955 = vrot.lane.b32.xlu0 %v876, 6
        %v956 = vpop.permute.xlu0 %955
        %957 = vrot.lane.b32.xlu0 %v879, 6
        %v958 = vpop.permute.xlu0 %957
        %959 = vrot.lane.b32.xlu0 %v885, 6
        %v960 = vpop.permute.xlu0 %959
        %961 = vrot.lane.b32.xlu0 %v888, 6
        %v962 = vpop.permute.xlu0 %961
        %963 = vrot.lane.b32.xlu0 %v894, 6
        %v964 = vpop.permute.xlu0 %963
        %965 = vrot.lane.b32.xlu0 %v897, 6
        %v966 = vpop.permute.xlu0 %965
        %967 = vrot.lane.b32.xlu0 %v903, 6
        %v968 = vpop.permute.xlu0 %967
        %969 = vrot.lane.b32.xlu0 %v906, 6
        %v970 = vpop.permute.xlu0 %969
        %vm1003 = vcmask 68656
        %1004 = vst.msk [vmem:[%s530] sm:$0xf] %vm1003, %v908
        %vm1005 = vcmask 68656
        %vm1006 = vmand %vm1005, %vm760
        %v1007 = vld [vmem:[%s530 + $0x4] sm:$0xf]
        %v1008 = vsel %vm1006, %v910, %v1007
        %1009 = vst [vmem:[%s530 + $0x4] sm:$0xf] %v1008
        %1010 = vst.msk [vmem:[%s530 + $0x8] sm:$0xf] %vm1003, %v912
        %v1011 = vld [vmem:[%s530 + $0xc] sm:$0xf]
        %v1012 = vsel %vm1006, %v914, %v1011
        %1013 = vst [vmem:[%s530 + $0xc] sm:$0xf] %v1012
        %1014 = vst.msk [vmem:[%s530 + $0x10] sm:$0xf] %vm1003, %v916
        %v1015 = vld [vmem:[%s530 + $0x14] sm:$0xf]
        %v1016 = vsel %vm1006, %v918, %v1015
        %1017 = vst [vmem:[%s530 + $0x14] sm:$0xf] %v1016
        %1018 = vst.msk [vmem:[%s530 + $0x18] sm:$0xf] %vm1003, %v920
        %v1019 = vld [vmem:[%s530 + $0x1c] sm:$0xf]
        %v1020 = vsel %vm1006, %v922, %v1019
        %1021 = vst [vmem:[%s530 + $0x1c] sm:$0xf] %v1020
        %1022 = vst.msk [vmem:[%s530 + $0x20] sm:$0xf] %vm1003, %v924
        %v1023 = vld [vmem:[%s530 + $0x24] sm:$0xf]
        %v1024 = vsel %vm1006, %v926, %v1023
        %1025 = vst [vmem:[%s530 + $0x24] sm:$0xf] %v1024
        %1026 = vst.msk [vmem:[%s530 + $0x28] sm:$0xf] %vm1003, %v928
        %v1027 = vld [vmem:[%s530 + $0x2c] sm:$0xf]
        %v1028 = vsel %vm1006, %v930, %v1027
        %1029 = vst [vmem:[%s530 + $0x2c] sm:$0xf] %v1028
        %1030 = vst.msk [vmem:[%s530 + $0x30] sm:$0xf] %vm1003, %v932
        %v1031 = vld [vmem:[%s530 + $0x34] sm:$0xf]
        %v1032 = vsel %vm1006, %v934, %v1031
        %1033 = vst [vmem:[%s530 + $0x34] sm:$0xf] %v1032
        %1034 = vst.msk [vmem:[%s530 + $0x38] sm:$0xf] %vm1003, %v936
        %v1035 = vld [vmem:[%s530 + $0x3c] sm:$0xf]
        %v1036 = vsel %vm1006, %v938, %v1035
        %1037 = vst [vmem:[%s530 + $0x3c] sm:$0xf] %v1036
        %1038 = vst.msk [vmem:[%s530 + $0x40] sm:$0xf] %vm1003, %v940
        %v1039 = vld [vmem:[%s530 + $0x44] sm:$0xf]
        %v1040 = vsel %vm1006, %v942, %v1039
        %1041 = vst [vmem:[%s530 + $0x44] sm:$0xf] %v1040
        %1042 = vst.msk [vmem:[%s530 + $0x48] sm:$0xf] %vm1003, %v944
        %v1043 = vld [vmem:[%s530 + $0x4c] sm:$0xf]
        %v1044 = vsel %vm1006, %v946, %v1043
        %1045 = vst [vmem:[%s530 + $0x4c] sm:$0xf] %v1044
        %1046 = vst.msk [vmem:[%s530 + $0x50] sm:$0xf] %vm1003, %v948
        %v1047 = vld [vmem:[%s530 + $0x54] sm:$0xf]
        %v1048 = vsel %vm1006, %v950, %v1047
        %1049 = vst [vmem:[%s530 + $0x54] sm:$0xf] %v1048
        %1050 = vst.msk [vmem:[%s530 + $0x58] sm:$0xf] %vm1003, %v952
        %v1051 = vld [vmem:[%s530 + $0x5c] sm:$0xf]
        %v1052 = vsel %vm1006, %v954, %v1051
        %1053 = vst [vmem:[%s530 + $0x5c] sm:$0xf] %v1052
        %1054 = vst.msk [vmem:[%s530 + $0x60] sm:$0xf] %vm1003, %v956
        %v1055 = vld [vmem:[%s530 + $0x64] sm:$0xf]
        %v1056 = vsel %vm1006, %v958, %v1055
        %1057 = vst [vmem:[%s530 + $0x64] sm:$0xf] %v1056
        %1058 = vst.msk [vmem:[%s530 + $0x68] sm:$0xf] %vm1003, %v960
        %v1059 = vld [vmem:[%s530 + $0x6c] sm:$0xf]
        %v1060 = vsel %vm1006, %v962, %v1059
        %1061 = vst [vmem:[%s530 + $0x6c] sm:$0xf] %v1060
        %1062 = vst.msk [vmem:[%s530 + $0x70] sm:$0xf] %vm1003, %v964
        %v1063 = vld [vmem:[%s530 + $0x74] sm:$0xf]
        %v1064 = vsel %vm1006, %v966, %v1063
        %1065 = vst [vmem:[%s530 + $0x74] sm:$0xf] %v1064
        %1066 = vst.msk [vmem:[%s530 + $0x78] sm:$0xf] %vm1003, %v968
        %v1067 = vld [vmem:[%s530 + $0x7c] sm:$0xf]
        %v1068 = vsel %vm1006, %v970, %v1067
        %1069 = vst [vmem:[%s530 + $0x7c] sm:$0xf] %v1068
        %v1070 = vld [vmem:[#allocation2] sm:$0xf]
        %v1071 = vld [vmem:[#allocation2 + $0x4] sm:$0xf]
        %v1072 = vld [vmem:[#allocation2 + $0x8] sm:$0xf]
        %v1073 = vld [vmem:[#allocation2 + $0xc] sm:$0xf]
        %v1074 = vld [vmem:[#allocation2 + $0x10] sm:$0xf]
        %v1075 = vld [vmem:[#allocation2 + $0x14] sm:$0xf]
        %v1076 = vld [vmem:[#allocation2 + $0x18] sm:$0xf]
        %v1077 = vld [vmem:[#allocation2 + $0x1c] sm:$0xf]
        %v1078 = vld [vmem:[#allocation2 + $0x20] sm:$0xf]
        %v1079 = vld [vmem:[#allocation2 + $0x24] sm:$0xf]
        %v1080 = vld [vmem:[#allocation2 + $0x28] sm:$0xf]
        %v1081 = vld [vmem:[#allocation2 + $0x2c] sm:$0xf]
        %v1082 = vld [vmem:[#allocation2 + $0x30] sm:$0xf]
        %v1083 = vld [vmem:[#allocation2 + $0x34] sm:$0xf]
        %v1084 = vld [vmem:[#allocation2 + $0x38] sm:$0xf]
        %v1085 = vld [vmem:[#allocation2 + $0x3c] sm:$0xf]
        %v1086 = vld [vmem:[#allocation2 + $0x40] sm:$0xf]
        %v1087 = vld [vmem:[#allocation2 + $0x44] sm:$0xf]
        %v1088 = vld [vmem:[#allocation2 + $0x48] sm:$0xf]
        %v1089 = vld [vmem:[#allocation2 + $0x4c] sm:$0xf]
        %v1090 = vld [vmem:[#allocation2 + $0x50] sm:$0xf]
        %v1091 = vld [vmem:[#allocation2 + $0x54] sm:$0xf]
        %v1092 = vld [vmem:[#allocation2 + $0x58] sm:$0xf]
        %v1093 = vld [vmem:[#allocation2 + $0x5c] sm:$0xf]
        %v1094 = vld [vmem:[#allocation2 + $0x60] sm:$0xf]
        %v1095 = vld [vmem:[#allocation2 + $0x64] sm:$0xf]
        %v1096 = vld [vmem:[#allocation2 + $0x68] sm:$0xf]
        %v1097 = vld [vmem:[#allocation2 + $0x6c] sm:$0xf]
        %v1098 = vld [vmem:[#allocation2 + $0x70] sm:$0xf]
        %v1099 = vld [vmem:[#allocation2 + $0x74] sm:$0xf]
        %v1100 = vld [vmem:[#allocation2 + $0x78] sm:$0xf]
        %v1101 = vld [vmem:[#allocation2 + $0x7c] sm:$0xf]
        %v1102 = vld [vmem:[%s530] sm:$0xf]
        %v1103 = vld [vmem:[%s530 + $0x4] sm:$0xf]
        %v1104 = vld [vmem:[%s530 + $0x8] sm:$0xf]
        %v1105 = vld [vmem:[%s530 + $0xc] sm:$0xf]
        %v1106 = vld [vmem:[%s530 + $0x10] sm:$0xf]
        %v1107 = vld [vmem:[%s530 + $0x14] sm:$0xf]
        %v1108 = vld [vmem:[%s530 + $0x18] sm:$0xf]
        %v1109 = vld [vmem:[%s530 + $0x1c] sm:$0xf]
        %v1110 = vld [vmem:[%s530 + $0x20] sm:$0xf]
        %v1111 = vld [vmem:[%s530 + $0x24] sm:$0xf]
        %v1112 = vld [vmem:[%s530 + $0x28] sm:$0xf]
        %v1113 = vld [vmem:[%s530 + $0x2c] sm:$0xf]
        %v1114 = vld [vmem:[%s530 + $0x30] sm:$0xf]
        %v1115 = vld [vmem:[%s530 + $0x34] sm:$0xf]
        %v1116 = vld [vmem:[%s530 + $0x38] sm:$0xf]
        %v1117 = vld [vmem:[%s530 + $0x3c] sm:$0xf]
        %v1118 = vld [vmem:[%s530 + $0x40] sm:$0xf]
        %v1119 = vld [vmem:[%s530 + $0x44] sm:$0xf]
        %v1120 = vld [vmem:[%s530 + $0x48] sm:$0xf]
        %v1121 = vld [vmem:[%s530 + $0x4c] sm:$0xf]
        %v1122 = vld [vmem:[%s530 + $0x50] sm:$0xf]
        %v1123 = vld [vmem:[%s530 + $0x54] sm:$0xf]
        %v1124 = vld [vmem:[%s530 + $0x58] sm:$0xf]
        %v1125 = vld [vmem:[%s530 + $0x5c] sm:$0xf]
        %v1126 = vld [vmem:[%s530 + $0x60] sm:$0xf]
        %v1127 = vld [vmem:[%s530 + $0x64] sm:$0xf]
        %v1128 = vld [vmem:[%s530 + $0x68] sm:$0xf]
        %v1129 = vld [vmem:[%s530 + $0x6c] sm:$0xf]
        %v1130 = vld [vmem:[%s530 + $0x70] sm:$0xf]
        %v1131 = vld [vmem:[%s530 + $0x74] sm:$0xf]
        %v1132 = vld [vmem:[%s530 + $0x78] sm:$0xf]
        %v1133 = vld [vmem:[%s530 + $0x7c] sm:$0xf]
        %s1134 = scalar_lea.vmem [#allocation2], 16
        %v1135 = vld [vmem:[%s1134] sm:$0xf]
        %v1136 = vld [vmem:[%s1134 + $0x4] sm:$0xf]
        %v1137 = vld [vmem:[%s1134 + $0x8] sm:$0xf]
        %v1138 = vld [vmem:[%s1134 + $0xc] sm:$0xf]
        %v1139 = vld [vmem:[%s1134 + $0x10] sm:$0xf]
        %v1140 = vld [vmem:[%s1134 + $0x14] sm:$0xf]
        %v1141 = vld [vmem:[%s1134 + $0x18] sm:$0xf]
        %v1142 = vld [vmem:[%s1134 + $0x1c] sm:$0xf]
        %v1143 = vld [vmem:[%s1134 + $0x20] sm:$0xf]
        %v1144 = vld [vmem:[%s1134 + $0x24] sm:$0xf]
        %v1145 = vld [vmem:[%s1134 + $0x28] sm:$0xf]
        %v1146 = vld [vmem:[%s1134 + $0x2c] sm:$0xf]
        %v1147 = vld [vmem:[%s1134 + $0x30] sm:$0xf]
        %v1148 = vld [vmem:[%s1134 + $0x34] sm:$0xf]
        %v1149 = vld [vmem:[%s1134 + $0x38] sm:$0xf]
        %v1150 = vld [vmem:[%s1134 + $0x3c] sm:$0xf]
        %v1151 = vld [vmem:[%s1134 + $0x40] sm:$0xf]
        %v1152 = vld [vmem:[%s1134 + $0x44] sm:$0xf]
        %v1153 = vld [vmem:[%s1134 + $0x48] sm:$0xf]
        %v1154 = vld [vmem:[%s1134 + $0x4c] sm:$0xf]
        %v1155 = vld [vmem:[%s1134 + $0x50] sm:$0xf]
        %v1156 = vld [vmem:[%s1134 + $0x54] sm:$0xf]
        %v1157 = vld [vmem:[%s1134 + $0x58] sm:$0xf]
        %v1158 = vld [vmem:[%s1134 + $0x5c] sm:$0xf]
        %v1159 = vld [vmem:[%s1134 + $0x60] sm:$0xf]
        %v1160 = vld [vmem:[%s1134 + $0x64] sm:$0xf]
        %v1161 = vld [vmem:[%s1134 + $0x68] sm:$0xf]
        %v1162 = vld [vmem:[%s1134 + $0x6c] sm:$0xf]
        %v1163 = vld [vmem:[%s1134 + $0x70] sm:$0xf]
        %v1164 = vld [vmem:[%s1134 + $0x74] sm:$0xf]
        %v1165 = vld [vmem:[%s1134 + $0x78] sm:$0xf]
        %v1166 = vld [vmem:[%s1134 + $0x7c] sm:$0xf]
        %v1199 = vunpack.c.l.b16 %v1070
        %v1200 = vunpack.c.l.b16 %v1071
        %v1201 = vunpack.c.l.b16 %v1072
        %v1202 = vunpack.c.l.b16 %v1073
        %v1203 = vunpack.c.l.b16 %v1074
        %v1204 = vunpack.c.l.b16 %v1075
        %v1205 = vunpack.c.l.b16 %v1076
        %v1206 = vunpack.c.l.b16 %v1077
        %v1207 = vunpack.c.l.b16 %v1078
        %v1208 = vunpack.c.l.b16 %v1079
        %v1209 = vunpack.c.l.b16 %v1080
        %v1210 = vunpack.c.l.b16 %v1081
        %v1211 = vunpack.c.l.b16 %v1082
        %v1212 = vunpack.c.l.b16 %v1083
        %v1213 = vunpack.c.l.b16 %v1084
        %v1214 = vunpack.c.l.b16 %v1085
        %v1215 = vunpack.c.l.b16 %v1086
        %v1216 = vunpack.c.l.b16 %v1087
        %v1217 = vunpack.c.l.b16 %v1088
        %v1218 = vunpack.c.l.b16 %v1089
        %v1219 = vunpack.c.l.b16 %v1090
        %v1220 = vunpack.c.l.b16 %v1091
        %v1221 = vunpack.c.l.b16 %v1092
        %v1222 = vunpack.c.l.b16 %v1093
        %v1223 = vunpack.c.l.b16 %v1094
        %v1224 = vunpack.c.l.b16 %v1095
        %v1225 = vunpack.c.l.b16 %v1096
        %v1226 = vunpack.c.l.b16 %v1097
        %v1227 = vunpack.c.l.b16 %v1098
        %v1228 = vunpack.c.l.b16 %v1099
        %v1229 = vunpack.c.l.b16 %v1100
        %v1230 = vunpack.c.l.b16 %v1101
        %v1231 = vpack.c.b16 %v1200, %v1199
        %v1232 = vpack.c.b16 %v1202, %v1201
        %v1233 = vpack.c.b16 %v1204, %v1203
        %v1234 = vpack.c.b16 %v1206, %v1205
        %v1235 = vpack.c.b16 %v1208, %v1207
        %v1236 = vpack.c.b16 %v1210, %v1209
        %v1237 = vpack.c.b16 %v1212, %v1211
        %v1238 = vpack.c.b16 %v1214, %v1213
        %v1239 = vpack.c.b16 %v1216, %v1215
        %v1240 = vpack.c.b16 %v1218, %v1217
        %v1241 = vpack.c.b16 %v1220, %v1219
        %v1242 = vpack.c.b16 %v1222, %v1221
        %v1243 = vpack.c.b16 %v1224, %v1223
        %v1244 = vpack.c.b16 %v1226, %v1225
        %v1245 = vpack.c.b16 %v1228, %v1227
        %v1246 = vpack.c.b16 %v1230, %v1229
        %v1279 = vunpack.c.l.b16 %v1102
        %v1280 = vunpack.c.l.b16 %v1103
        %v1281 = vunpack.c.l.b16 %v1104
        %v1282 = vunpack.c.l.b16 %v1105
        %v1283 = vunpack.c.l.b16 %v1106
        %v1284 = vunpack.c.l.b16 %v1107
        %v1285 = vunpack.c.l.b16 %v1108
        %v1286 = vunpack.c.l.b16 %v1109
        %v1287 = vunpack.c.l.b16 %v1110
        %v1288 = vunpack.c.l.b16 %v1111
        %v1289 = vunpack.c.l.b16 %v1112
        %v1290 = vunpack.c.l.b16 %v1113
        %v1291 = vunpack.c.l.b16 %v1114
        %v1292 = vunpack.c.l.b16 %v1115
        %v1293 = vunpack.c.l.b16 %v1116
        %v1294 = vunpack.c.l.b16 %v1117
        %v1295 = vunpack.c.l.b16 %v1118
        %v1296 = vunpack.c.l.b16 %v1119
        %v1297 = vunpack.c.l.b16 %v1120
        %v1298 = vunpack.c.l.b16 %v1121
        %v1299 = vunpack.c.l.b16 %v1122
        %v1300 = vunpack.c.l.b16 %v1123
        %v1301 = vunpack.c.l.b16 %v1124
        %v1302 = vunpack.c.l.b16 %v1125
        %v1303 = vunpack.c.l.b16 %v1126
        %v1304 = vunpack.c.l.b16 %v1127
        %v1305 = vunpack.c.l.b16 %v1128
        %v1306 = vunpack.c.l.b16 %v1129
        %v1307 = vunpack.c.l.b16 %v1130
        %v1308 = vunpack.c.l.b16 %v1131
        %v1309 = vunpack.c.l.b16 %v1132
        %v1310 = vunpack.c.l.b16 %v1133
        %v1311 = vpack.c.b16 %v1280, %v1279
        %v1312 = vpack.c.b16 %v1282, %v1281
        %v1313 = vpack.c.b16 %v1284, %v1283
        %v1314 = vpack.c.b16 %v1286, %v1285
        %v1315 = vpack.c.b16 %v1288, %v1287
        %v1316 = vpack.c.b16 %v1290, %v1289
        %v1317 = vpack.c.b16 %v1292, %v1291
        %v1318 = vpack.c.b16 %v1294, %v1293
        %v1319 = vpack.c.b16 %v1296, %v1295
        %v1320 = vpack.c.b16 %v1298, %v1297
        %v1321 = vpack.c.b16 %v1300, %v1299
        %v1322 = vpack.c.b16 %v1302, %v1301
        %v1323 = vpack.c.b16 %v1304, %v1303
        %v1324 = vpack.c.b16 %v1306, %v1305
        %v1325 = vpack.c.b16 %v1308, %v1307
        %v1326 = vpack.c.b16 %v1310, %v1309
        %1327 = vrot.lane.b32.xlu0 %v1311, 9
        %v1328 = vpop.permute.xlu0 %1327
        %1329 = vrot.lane.b32.xlu0 %v1312, 9
        %v1330 = vpop.permute.xlu0 %1329
        %1331 = vrot.lane.b32.xlu0 %v1313, 9
        %v1332 = vpop.permute.xlu0 %1331
        %1333 = vrot.lane.b32.xlu0 %v1314, 9
        %v1334 = vpop.permute.xlu0 %1333
        %1335 = vrot.lane.b32.xlu0 %v1315, 9
        %v1336 = vpop.permute.xlu0 %1335
        %1337 = vrot.lane.b32.xlu0 %v1316, 9
        %v1338 = vpop.permute.xlu0 %1337
        %1339 = vrot.lane.b32.xlu0 %v1317, 9
        %v1340 = vpop.permute.xlu0 %1339
        %1341 = vrot.lane.b32.xlu0 %v1318, 9
        %v1342 = vpop.permute.xlu0 %1341
        %1343 = vrot.lane.b32.xlu0 %v1319, 9
        %v1344 = vpop.permute.xlu0 %1343
        %1345 = vrot.lane.b32.xlu0 %v1320, 9
        %v1346 = vpop.permute.xlu0 %1345
        %1347 = vrot.lane.b32.xlu0 %v1321, 9
        %v1348 = vpop.permute.xlu0 %1347
        %1349 = vrot.lane.b32.xlu0 %v1322, 9
        %v1350 = vpop.permute.xlu0 %1349
        %1351 = vrot.lane.b32.xlu0 %v1323, 9
        %v1352 = vpop.permute.xlu0 %1351
        %1353 = vrot.lane.b32.xlu0 %v1324, 9
        %v1354 = vpop.permute.xlu0 %1353
        %1355 = vrot.lane.b32.xlu0 %v1325, 9
        %v1356 = vpop.permute.xlu0 %1355
        %1357 = vrot.lane.b32.xlu0 %v1326, 9
        %v1358 = vpop.permute.xlu0 %1357
        %v1391 = vunpack.c.l.b16 %v1135
        %v1392 = vunpack.c.l.b16 %v1136
        %v1393 = vunpack.c.l.b16 %v1137
        %v1394 = vunpack.c.l.b16 %v1138
        %v1395 = vunpack.c.l.b16 %v1139
        %v1396 = vunpack.c.l.b16 %v1140
        %v1397 = vunpack.c.l.b16 %v1141
        %v1398 = vunpack.c.l.b16 %v1142
        %v1399 = vunpack.c.l.b16 %v1143
        %v1400 = vunpack.c.l.b16 %v1144
        %v1401 = vunpack.c.l.b16 %v1145
        %v1402 = vunpack.c.l.b16 %v1146
        %v1403 = vunpack.c.l.b16 %v1147
        %v1404 = vunpack.c.l.b16 %v1148
        %v1405 = vunpack.c.l.b16 %v1149
        %v1406 = vunpack.c.l.b16 %v1150
        %v1407 = vunpack.c.l.b16 %v1151
        %v1408 = vunpack.c.l.b16 %v1152
        %v1409 = vunpack.c.l.b16 %v1153
        %v1410 = vunpack.c.l.b16 %v1154
        %v1411 = vunpack.c.l.b16 %v1155
        %v1412 = vunpack.c.l.b16 %v1156
        %v1413 = vunpack.c.l.b16 %v1157
        %v1414 = vunpack.c.l.b16 %v1158
        %v1415 = vunpack.c.l.b16 %v1159
        %v1416 = vunpack.c.l.b16 %v1160
        %v1417 = vunpack.c.l.b16 %v1161
        %v1418 = vunpack.c.l.b16 %v1162
        %v1419 = vunpack.c.l.b16 %v1163
        %v1420 = vunpack.c.l.b16 %v1164
        %v1421 = vunpack.c.l.b16 %v1165
        %v1422 = vunpack.c.l.b16 %v1166
        %v1423 = vpack.c.b16 %v1392, %v1391
        %v1424 = vpack.c.b16 %v1394, %v1393
        %v1425 = vpack.c.b16 %v1396, %v1395
        %v1426 = vpack.c.b16 %v1398, %v1397
        %v1427 = vpack.c.b16 %v1400, %v1399
        %v1428 = vpack.c.b16 %v1402, %v1401
        %v1429 = vpack.c.b16 %v1404, %v1403
        %v1430 = vpack.c.b16 %v1406, %v1405
        %v1431 = vpack.c.b16 %v1408, %v1407
        %v1432 = vpack.c.b16 %v1410, %v1409
        %v1433 = vpack.c.b16 %v1412, %v1411
        %v1434 = vpack.c.b16 %v1414, %v1413
        %v1435 = vpack.c.b16 %v1416, %v1415
        %v1436 = vpack.c.b16 %v1418, %v1417
        %v1437 = vpack.c.b16 %v1420, %v1419
        %v1438 = vpack.c.b16 %v1422, %v1421
        %1439 = vrot.lane.b32.xlu0 %v1423, 18
        %v1440 = vpop.permute.xlu0 %1439
        %1441 = vrot.lane.b32.xlu0 %v1424, 18
        %v1442 = vpop.permute.xlu0 %1441
        %1443 = vrot.lane.b32.xlu0 %v1425, 18
        %v1444 = vpop.permute.xlu0 %1443
        %1445 = vrot.lane.b32.xlu0 %v1426, 18
        %v1446 = vpop.permute.xlu0 %1445
        %1447 = vrot.lane.b32.xlu0 %v1427, 18
        %v1448 = vpop.permute.xlu0 %1447
        %1449 = vrot.lane.b32.xlu0 %v1428, 18
        %v1450 = vpop.permute.xlu0 %1449
        %1451 = vrot.lane.b32.xlu0 %v1429, 18
        %v1452 = vpop.permute.xlu0 %1451
        %1453 = vrot.lane.b32.xlu0 %v1430, 18
        %v1454 = vpop.permute.xlu0 %1453
        %1455 = vrot.lane.b32.xlu0 %v1431, 18
        %v1456 = vpop.permute.xlu0 %1455
        %1457 = vrot.lane.b32.xlu0 %v1432, 18
        %v1458 = vpop.permute.xlu0 %1457
        %1459 = vrot.lane.b32.xlu0 %v1433, 18
        %v1460 = vpop.permute.xlu0 %1459
        %1461 = vrot.lane.b32.xlu0 %v1434, 18
        %v1462 = vpop.permute.xlu0 %1461
        %1463 = vrot.lane.b32.xlu0 %v1435, 18
        %v1464 = vpop.permute.xlu0 %1463
        %1465 = vrot.lane.b32.xlu0 %v1436, 18
        %v1466 = vpop.permute.xlu0 %1465
        %1467 = vrot.lane.b32.xlu0 %v1437, 18
        %v1468 = vpop.permute.xlu0 %1467
        %1469 = vrot.lane.b32.xlu0 %v1438, 18
        %v1470 = vpop.permute.xlu0 %1469
        %vm1471 = vcmask 72704
        %v1474 = vsel %vm1471, %v1231, %v1328
        %v1477 = vsel %vm1471, %v1232, %v1330
        %v1480 = vsel %vm1471, %v1233, %v1332
        %v1483 = vsel %vm1471, %v1234, %v1334
        %v1486 = vsel %vm1471, %v1235, %v1336
        %v1489 = vsel %vm1471, %v1236, %v1338
        %v1492 = vsel %vm1471, %v1237, %v1340
        %v1495 = vsel %vm1471, %v1238, %v1342
        %v1498 = vsel %vm1471, %v1239, %v1344
        %v1501 = vsel %vm1471, %v1240, %v1346
        %v1504 = vsel %vm1471, %v1241, %v1348
        %v1507 = vsel %vm1471, %v1242, %v1350
        %v1510 = vsel %vm1471, %v1243, %v1352
        %v1513 = vsel %vm1471, %v1244, %v1354
        %v1516 = vsel %vm1471, %v1245, %v1356
        %v1519 = vsel %vm1471, %v1246, %v1358
        %vm1520 = vcmask 146432
        %v1522 = vsel %vm1520, %v1474, %v1440
        %v1524 = vsel %vm1520, %v1477, %v1442
        %v1526 = vsel %vm1520, %v1480, %v1444
        %v1528 = vsel %vm1520, %v1483, %v1446
        %v1530 = vsel %vm1520, %v1486, %v1448
        %v1532 = vsel %vm1520, %v1489, %v1450
        %v1534 = vsel %vm1520, %v1492, %v1452
        %v1536 = vsel %vm1520, %v1495, %v1454
        %v1538 = vsel %vm1520, %v1498, %v1456
        %v1540 = vsel %vm1520, %v1501, %v1458
        %v1542 = vsel %vm1520, %v1504, %v1460
        %v1544 = vsel %vm1520, %v1507, %v1462
        %v1546 = vsel %vm1520, %v1510, %v1464
        %v1548 = vsel %vm1520, %v1513, %v1466
        %v1550 = vsel %vm1520, %v1516, %v1468
        %v1552 = vsel %vm1520, %v1519, %v1470
        %v1553 = vld [vmem:[%s1] sm:$0xf]
        %v1554 = vld [vmem:[%s1 + $0x4] sm:$0xf]
        %v1555 = vld [vmem:[%s1 + $0x8] sm:$0xf]
        %v1556 = vld [vmem:[%s1 + $0xc] sm:$0x3]
        %v1557 = vld [vmem:[%s2] sm:$0x1]
        %v1559 = vlaneseq
        %v1560 = vshrl.u32 %v1559, 7
        %v1561 = vsub.s32 0, %v1560
        %v1562 = vrot.slane %v1557, %v1561
        %v1568 = vunpack.c.l.b16 %v1553
        %v1569 = vunpack.c.l.b16 %v1554
        %v1570 = vunpack.c.l.b16 %v1555
        %v1571 = vunpack.c.l.b16 %v1556
        %v1572 = vpack.c.b16 %v1569, %v1568
        %v1573 = vpack.c.b16 %v1571, %v1570
        %vm1575 = vcmask 220160
        %v1576 = vsel %vm1575, %v1522, 0
        %v1578 = vsel %vm1575, %v1524, 0
        %v1580 = vsel %vm1575, %v1526, 0
        %v1582 = vsel %vm1575, %v1528, 0
        %v1584 = vsel %vm1575, %v1530, 0
        %v1586 = vsel %vm1575, %v1532, 0
        %v1588 = vsel %vm1575, %v1534, 0
        %v1590 = vsel %vm1575, %v1536, 0
        %v1592 = vsel %vm1575, %v1538, 0
        %v1594 = vsel %vm1575, %v1540, 0
        %v1596 = vsel %vm1575, %v1542, 0
        %v1598 = vsel %vm1575, %v1544, 0
        %v1600 = vsel %vm1575, %v1546, 0
        %v1602 = vsel %vm1575, %v1548, 0
        %v1604 = vsel %vm1575, %v1550, 0
        %v1606 = vsel %vm1575, %v1552, 0
        %vm1608 = vcmask 1044480
        %vm1609 = vcmask 1045504
        %v1610 = vsel %vm1608, 4294967295, 65535
        %v1611 = vsel %vm1609, %v1610, 0
        %v1613 = vand.u32 %v1573, %v1611
        %1615 = vmatprep.subr.bf16.mxu0 0
        %1616 = vmatpush1.bf16.msra.mxu0 0
        %1617 = vmatprep.subr.bf16.mxu0 0
        %1618 = vmatpush1.bf16.msra.mxu0 0
        %1619 = vmatprep.subr.bf16.mxu0 0
        %1620 = vmatpush1.bf16.msra.mxu0 0
        %1621 = vmatprep.subr.bf16.mxu0 0
        %1622 = vmatpush1.bf16.msra.mxu0 0
        %1623 = vmatprep.subr.bf16.mxu0 0
        %1624 = vmatpush1.bf16.msra.mxu0 0
        %1625 = vmatprep.subr.bf16.mxu0 0
        %1626 = vmatpush1.bf16.msra.mxu0 0
        %1627 = vmatprep.subr.bf16.mxu0 0
        %1628 = vmatpush1.bf16.msra.mxu0 %v1613
        %1629 = vmatprep.subr.bf16.mxu0 0
        %1630 = vmatpush1.bf16.msra.mxu0 %v1572
        %1631 = vmatprep.subr.bf16.mxu0 0
        %1632 = vmatpush2.bf16.msra.mxu0 0
        %1633 = vmatprep.subr.bf16.mxu0 0
        %1634 = vmatpush2.bf16.msra.mxu0 0
        %1635 = vmatprep.subr.bf16.mxu0 0
        %1636 = vmatpush2.bf16.msra.mxu0 0
        %1637 = vmatprep.subr.bf16.mxu0 0
        %1638 = vmatpush2.bf16.msra.mxu0 0
        %1639 = vmatprep.subr.bf16.mxu0 0
        %1640 = vmatpush2.bf16.msra.mxu0 0
        %1641 = vmatprep.subr.bf16.mxu0 0
        %1642 = vmatpush2.bf16.msra.mxu0 0
        %1643 = vmatprep.subr.bf16.mxu0 0
        %1644 = vmatpush2.bf16.msra.mxu0 0
        %1645 = vmatprep.subr.bf16.mxu0 0
        %1646 = vmatpush2.bf16.msra.mxu0 0
        %1647 = vmatprep.mubr.bf16.mxu0 0
        %1648 = vmatmul.mubr.bf16.gmra.mxu0 %v1576
        %v1649 = vpop.f32.mrf.mxu0
        %v1650 = vadd.f32 %v1562, %v1649
        %v1651 = vpop.f32.mrf.mxu0
        %v1652 = vpop.f32.mrf.mxu0
        %v1653 = vadd.f32 %v1562, %v1652
        %v1654 = vpop.f32.mrf.mxu0
        %1655 = vmatprep.mubr.bf16.mxu0 0
        %1656 = vmatmul.mubr.bf16.gmra.mxu0 %v1578
        %v1657 = vpop.f32.mrf.mxu0
        %v1658 = vadd.f32 %v1562, %v1657
        %v1659 = vpop.f32.mrf.mxu0
        %v1660 = vpop.f32.mrf.mxu0
        %v1661 = vadd.f32 %v1562, %v1660
        %v1662 = vpop.f32.mrf.mxu0
        %1663 = vmatprep.mubr.bf16.mxu0 0
        %1664 = vmatmul.mubr.bf16.gmra.mxu0 %v1580
        %v1665 = vpop.f32.mrf.mxu0
        %v1666 = vadd.f32 %v1562, %v1665
        %v1667 = vpop.f32.mrf.mxu0
        %v1668 = vpop.f32.mrf.mxu0
        %v1669 = vadd.f32 %v1562, %v1668
        %v1670 = vpop.f32.mrf.mxu0
        %1671 = vmatprep.mubr.bf16.mxu0 0
        %1672 = vmatmul.mubr.bf16.gmra.mxu0 %v1582
        %v1673 = vpop.f32.mrf.mxu0
        %v1674 = vadd.f32 %v1562, %v1673
        %v1675 = vpop.f32.mrf.mxu0
        %v1676 = vpop.f32.mrf.mxu0
        %v1677 = vadd.f32 %v1562, %v1676
        %v1678 = vpop.f32.mrf.mxu0
        %1679 = vmatprep.mubr.bf16.mxu0 0
        %1680 = vmatmul.mubr.bf16.gmra.mxu0 %v1584
        %v1681 = vpop.f32.mrf.mxu0
        %v1682 = vadd.f32 %v1562, %v1681
        %v1683 = vpop.f32.mrf.mxu0
        %v1684 = vpop.f32.mrf.mxu0
        %v1685 = vadd.f32 %v1562, %v1684
        %v1686 = vpop.f32.mrf.mxu0
        %1687 = vmatprep.mubr.bf16.mxu0 0
        %1688 = vmatmul.mubr.bf16.gmra.mxu0 %v1586
        %v1689 = vpop.f32.mrf.mxu0
        %v1690 = vadd.f32 %v1562, %v1689
        %v1691 = vpop.f32.mrf.mxu0
        %v1692 = vpop.f32.mrf.mxu0
        %v1693 = vadd.f32 %v1562, %v1692
        %v1694 = vpop.f32.mrf.mxu0
        %1695 = vmatprep.mubr.bf16.mxu0 0
        %1696 = vmatmul.mubr.bf16.gmra.mxu0 %v1588
        %v1697 = vpop.f32.mrf.mxu0
        %v1698 = vadd.f32 %v1562, %v1697
        %v1699 = vpop.f32.mrf.mxu0
        %v1700 = vpop.f32.mrf.mxu0
        %v1701 = vadd.f32 %v1562, %v1700
        %v1702 = vpop.f32.mrf.mxu0
        %1703 = vmatprep.mubr.bf16.mxu0 0
        %1704 = vmatmul.mubr.bf16.gmra.mxu0 %v1590
        %v1705 = vpop.f32.mrf.mxu0
        %v1706 = vadd.f32 %v1562, %v1705
        %v1707 = vpop.f32.mrf.mxu0
        %v1708 = vpop.f32.mrf.mxu0
        %v1709 = vadd.f32 %v1562, %v1708
        %v1710 = vpop.f32.mrf.mxu0
        %1711 = vmatprep.mubr.bf16.mxu0 0
        %1712 = vmatmul.mubr.bf16.gmra.mxu0 %v1592
        %v1713 = vpop.f32.mrf.mxu0
        %v1714 = vadd.f32 %v1562, %v1713
        %v1715 = vpop.f32.mrf.mxu0
        %v1716 = vpop.f32.mrf.mxu0
        %v1717 = vadd.f32 %v1562, %v1716
        %v1718 = vpop.f32.mrf.mxu0
        %1719 = vmatprep.mubr.bf16.mxu0 0
        %1720 = vmatmul.mubr.bf16.gmra.mxu0 %v1594
        %v1721 = vpop.f32.mrf.mxu0
        %v1722 = vadd.f32 %v1562, %v1721
        %v1723 = vpop.f32.mrf.mxu0
        %v1724 = vpop.f32.mrf.mxu0
        %v1725 = vadd.f32 %v1562, %v1724
        %v1726 = vpop.f32.mrf.mxu0
        %1727 = vmatprep.mubr.bf16.mxu0 0
        %1728 = vmatmul.mubr.bf16.gmra.mxu0 %v1596
        %v1729 = vpop.f32.mrf.mxu0
        %v1730 = vadd.f32 %v1562, %v1729
        %v1731 = vpop.f32.mrf.mxu0
        %v1732 = vpop.f32.mrf.mxu0
        %v1733 = vadd.f32 %v1562, %v1732
        %v1734 = vpop.f32.mrf.mxu0
        %1735 = vmatprep.mubr.bf16.mxu0 0
        %1736 = vmatmul.mubr.bf16.gmra.mxu0 %v1598
        %v1737 = vpop.f32.mrf.mxu0
        %v1738 = vadd.f32 %v1562, %v1737
        %v1739 = vpop.f32.mrf.mxu0
        %v1740 = vpop.f32.mrf.mxu0
        %v1741 = vadd.f32 %v1562, %v1740
        %v1742 = vpop.f32.mrf.mxu0
        %1743 = vmatprep.mubr.bf16.mxu0 0
        %1744 = vmatmul.mubr.bf16.gmra.mxu0 %v1600
        %v1745 = vpop.f32.mrf.mxu0
        %v1746 = vadd.f32 %v1562, %v1745
        %v1747 = vpop.f32.mrf.mxu0
        %v1748 = vpop.f32.mrf.mxu0
        %v1749 = vadd.f32 %v1562, %v1748
        %v1750 = vpop.f32.mrf.mxu0
        %1751 = vmatprep.mubr.bf16.mxu0 0
        %1752 = vmatmul.mubr.bf16.gmra.mxu0 %v1602
        %v1753 = vpop.f32.mrf.mxu0
        %v1754 = vadd.f32 %v1562, %v1753
        %v1755 = vpop.f32.mrf.mxu0
        %v1756 = vpop.f32.mrf.mxu0
        %v1757 = vadd.f32 %v1562, %v1756
        %v1758 = vpop.f32.mrf.mxu0
        %1759 = vmatprep.mubr.bf16.mxu0 0
        %1760 = vmatmul.mubr.bf16.gmra.mxu0 %v1604
        %v1761 = vpop.f32.mrf.mxu0
        %v1762 = vadd.f32 %v1562, %v1761
        %v1763 = vpop.f32.mrf.mxu0
        %v1764 = vpop.f32.mrf.mxu0
        %v1765 = vadd.f32 %v1562, %v1764
        %v1766 = vpop.f32.mrf.mxu0
        %1767 = vmatprep.mubr.bf16.mxu0 0
        %1768 = vmatmul.mubr.bf16.gmra.mxu0 %v1606
        %v1769 = vpop.f32.mrf.mxu0
        %v1770 = vadd.f32 %v1562, %v1769
        %v1771 = vpop.f32.mrf.mxu0
        %v1772 = vpop.f32.mrf.mxu0
        %v1773 = vadd.f32 %v1562, %v1772
        %v1774 = vpop.f32.mrf.mxu0
        %1775 = vdwg.mxu0
        %v1776 = vmax.f32 %v1650, 0.0
        %v1777 = vmax.f32 %v1653, 0.0
        %v1778 = vmax.f32 %v1658, 0.0
        %v1779 = vmax.f32 %v1661, 0.0
        %v1780 = vmax.f32 %v1666, 0.0
        %v1781 = vmax.f32 %v1669, 0.0
        %v1782 = vmax.f32 %v1674, 0.0
        %v1783 = vmax.f32 %v1677, 0.0
        %v1784 = vmax.f32 %v1682, 0.0
        %v1785 = vmax.f32 %v1685, 0.0
        %v1786 = vmax.f32 %v1690, 0.0
        %v1787 = vmax.f32 %v1693, 0.0
        %v1788 = vmax.f32 %v1698, 0.0
        %v1789 = vmax.f32 %v1701, 0.0
        %v1790 = vmax.f32 %v1706, 0.0
        %v1791 = vmax.f32 %v1709, 0.0
        %v1792 = vmax.f32 %v1714, 0.0
        %v1793 = vmax.f32 %v1717, 0.0
        %v1794 = vmax.f32 %v1722, 0.0
        %v1795 = vmax.f32 %v1725, 0.0
        %v1796 = vmax.f32 %v1730, 0.0
        %v1797 = vmax.f32 %v1733, 0.0
        %v1798 = vmax.f32 %v1738, 0.0
        %v1799 = vmax.f32 %v1741, 0.0
        %v1800 = vmax.f32 %v1746, 0.0
        %v1801 = vmax.f32 %v1749, 0.0
        %v1802 = vmax.f32 %v1754, 0.0
        %v1803 = vmax.f32 %v1757, 0.0
        %v1804 = vmax.f32 %v1762, 0.0
        %v1805 = vmax.f32 %v1765, 0.0
        %v1806 = vmax.f32 %v1770, 0.0
        %v1807 = vmax.f32 %v1773, 0.0
        %v1808 = vpack.c.bf16 %v1777, %v1776
        %v1809 = vpack.c.bf16 %v1779, %v1778
        %v1810 = vpack.c.bf16 %v1781, %v1780
        %v1811 = vpack.c.bf16 %v1783, %v1782
        %v1812 = vpack.c.bf16 %v1785, %v1784
        %v1813 = vpack.c.bf16 %v1787, %v1786
        %v1814 = vpack.c.bf16 %v1789, %v1788
        %v1815 = vpack.c.bf16 %v1791, %v1790
        %v1816 = vpack.c.bf16 %v1793, %v1792
        %v1817 = vpack.c.bf16 %v1795, %v1794
        %v1818 = vpack.c.bf16 %v1797, %v1796
        %v1819 = vpack.c.bf16 %v1799, %v1798
        %v1820 = vpack.c.bf16 %v1801, %v1800
        %v1821 = vpack.c.bf16 %v1803, %v1802
        %v1822 = vpack.c.bf16 %v1805, %v1804
        %v1823 = vpack.c.bf16 %v1807, %v1806
        %v1840 = vunpack.c.l.b16 %v1808
        %v1841 = vunpack.c.h.b16 %v1808
        %v1842 = vunpack.c.l.b16 %v1809
        %v1843 = vunpack.c.h.b16 %v1809
        %v1844 = vunpack.c.l.b16 %v1810
        %v1845 = vunpack.c.h.b16 %v1810
        %v1846 = vunpack.c.l.b16 %v1811
        %v1847 = vunpack.c.h.b16 %v1811
        %v1848 = vunpack.c.l.b16 %v1812
        %v1849 = vunpack.c.h.b16 %v1812
        %v1850 = vunpack.c.l.b16 %v1813
        %v1851 = vunpack.c.h.b16 %v1813
        %v1852 = vunpack.c.l.b16 %v1814
        %v1853 = vunpack.c.h.b16 %v1814
        %v1854 = vunpack.c.l.b16 %v1815
        %v1855 = vunpack.c.h.b16 %v1815
        %v1856 = vunpack.c.l.b16 %v1816
        %v1857 = vunpack.c.h.b16 %v1816
        %v1858 = vunpack.c.l.b16 %v1817
        %v1859 = vunpack.c.h.b16 %v1817
        %v1860 = vunpack.c.l.b16 %v1818
        %v1861 = vunpack.c.h.b16 %v1818
        %v1862 = vunpack.c.l.b16 %v1819
        %v1863 = vunpack.c.h.b16 %v1819
        %v1864 = vunpack.c.l.b16 %v1820
        %v1865 = vunpack.c.h.b16 %v1820
        %v1866 = vunpack.c.l.b16 %v1821
        %v1867 = vunpack.c.h.b16 %v1821
        %v1868 = vunpack.c.l.b16 %v1822
        %v1869 = vunpack.c.h.b16 %v1822
        %v1870 = vunpack.c.l.b16 %v1823
        %v1871 = vunpack.c.h.b16 %v1823
        %v1872 = vpack.c.b16 %v1840, %v1840
        %v1873 = vpack.c.b16 %v1841, %v1841
        %v1874 = vpack.c.b16 %v1842, %v1842
        %v1875 = vpack.c.b16 %v1843, %v1843
        %v1876 = vpack.c.b16 %v1844, %v1844
        %v1877 = vpack.c.b16 %v1845, %v1845
        %v1878 = vpack.c.b16 %v1846, %v1846
        %v1879 = vpack.c.b16 %v1847, %v1847
        %v1880 = vpack.c.b16 %v1848, %v1848
        %v1881 = vpack.c.b16 %v1849, %v1849
        %v1882 = vpack.c.b16 %v1850, %v1850
        %v1883 = vpack.c.b16 %v1851, %v1851
        %v1884 = vpack.c.b16 %v1852, %v1852
        %v1885 = vpack.c.b16 %v1853, %v1853
        %v1886 = vpack.c.b16 %v1854, %v1854
        %v1887 = vpack.c.b16 %v1855, %v1855
        %v1888 = vpack.c.b16 %v1856, %v1856
        %v1889 = vpack.c.b16 %v1857, %v1857
        %v1890 = vpack.c.b16 %v1858, %v1858
        %v1891 = vpack.c.b16 %v1859, %v1859
        %v1892 = vpack.c.b16 %v1860, %v1860
        %v1893 = vpack.c.b16 %v1861, %v1861
        %v1894 = vpack.c.b16 %v1862, %v1862
        %v1895 = vpack.c.b16 %v1863, %v1863
        %v1896 = vpack.c.b16 %v1864, %v1864
        %v1897 = vpack.c.b16 %v1865, %v1865
        %v1898 = vpack.c.b16 %v1866, %v1866
        %v1899 = vpack.c.b16 %v1867, %v1867
        %v1900 = vpack.c.b16 %v1868, %v1868
        %v1901 = vpack.c.b16 %v1869, %v1869
        %v1902 = vpack.c.b16 %v1870, %v1870
        %v1903 = vpack.c.b16 %v1871, %v1871
        %vm1936 = vcmask 519168
        %1937 = vst.msk [vmem:[%s163] sm:$0xf] %vm1936, %v1872
        %1938 = vst.msk [vmem:[%s163 + $0x4] sm:$0xf] %vm1936, %v1873
        %1939 = vst.msk [vmem:[%s163 + $0x8] sm:$0xf] %vm1936, %v1874
        %1940 = vst.msk [vmem:[%s163 + $0xc] sm:$0xf] %vm1936, %v1875
        %1941 = vst.msk [vmem:[%s163 + $0x10] sm:$0xf] %vm1936, %v1876
        %1942 = vst.msk [vmem:[%s163 + $0x14] sm:$0xf] %vm1936, %v1877
        %1943 = vst.msk [vmem:[%s163 + $0x18] sm:$0xf] %vm1936, %v1878
        %1944 = vst.msk [vmem:[%s163 + $0x1c] sm:$0xf] %vm1936, %v1879
        %1945 = vst.msk [vmem:[%s163 + $0x20] sm:$0xf] %vm1936, %v1880
        %1946 = vst.msk [vmem:[%s163 + $0x24] sm:$0xf] %vm1936, %v1881
        %1947 = vst.msk [vmem:[%s163 + $0x28] sm:$0xf] %vm1936, %v1882
        %1948 = vst.msk [vmem:[%s163 + $0x2c] sm:$0xf] %vm1936, %v1883
        %1949 = vst.msk [vmem:[%s163 + $0x30] sm:$0xf] %vm1936, %v1884
        %1950 = vst.msk [vmem:[%s163 + $0x34] sm:$0xf] %vm1936, %v1885
        %1951 = vst.msk [vmem:[%s163 + $0x38] sm:$0xf] %vm1936, %v1886
        %1952 = vst.msk [vmem:[%s163 + $0x3c] sm:$0xf] %vm1936, %v1887
        %1953 = vst.msk [vmem:[%s163 + $0x40] sm:$0xf] %vm1936, %v1888
        %1954 = vst.msk [vmem:[%s163 + $0x44] sm:$0xf] %vm1936, %v1889
        %1955 = vst.msk [vmem:[%s163 + $0x48] sm:$0xf] %vm1936, %v1890
        %1956 = vst.msk [vmem:[%s163 + $0x4c] sm:$0xf] %vm1936, %v1891
        %1957 = vst.msk [vmem:[%s163 + $0x50] sm:$0xf] %vm1936, %v1892
        %1958 = vst.msk [vmem:[%s163 + $0x54] sm:$0xf] %vm1936, %v1893
        %1959 = vst.msk [vmem:[%s163 + $0x58] sm:$0xf] %vm1936, %v1894
        %1960 = vst.msk [vmem:[%s163 + $0x5c] sm:$0xf] %vm1936, %v1895
        %1961 = vst.msk [vmem:[%s163 + $0x60] sm:$0xf] %vm1936, %v1896
        %1962 = vst.msk [vmem:[%s163 + $0x64] sm:$0xf] %vm1936, %v1897
        %1963 = vst.msk [vmem:[%s163 + $0x68] sm:$0xf] %vm1936, %v1898
        %1964 = vst.msk [vmem:[%s163 + $0x6c] sm:$0xf] %vm1936, %v1899
        %1965 = vst.msk [vmem:[%s163 + $0x70] sm:$0xf] %vm1936, %v1900
        %1966 = vst.msk [vmem:[%s163 + $0x74] sm:$0xf] %vm1936, %v1901
        %1967 = vst.msk [vmem:[%s163 + $0x78] sm:$0xf] %vm1936, %v1902
        %1968 = vst.msk [vmem:[%s163 + $0x7c] sm:$0xf] %vm1936, %v1903
        %s1969 = sand.u32 %s93, 1
        %s1970 = scalar_lea.sflag [#allocation4], %s1969
        %s1971 = sand.u32 %s93, 1
        %s1972 = smul.addr %s1971, 128
        %s1973 = scalar_lea.vmem [#allocation3], %s1972
        // Predicated region
        $region33: #{tpu_custom_call.1} parent=31 // pred_check
          %p1974 = pneg %p103
        $region34: #{tpu_custom_call.1} parent=31 // pred_check_branch
          %1976 = sbr.rel (%p1974) target = $region36
        $region35: #{tpu_custom_call.1} parent=31 // pred_region
          %s1978 = ssub.s32 2048, 2048
          %1979 = vsyncadd %s1970, %s1978
          %s1980 = smul.addr %s17, 32
          %s1981 = smul.addr %s1980, 64
          %s1982 = scalar_lea.hbm %s3, %s1981
          %s1983 = sshll.u32 %s1973, 4
          %s1984 = int_to_ptr.vmem [resolvable:$true] %s1983
          %1989 = dma.vmem_to_hbm [thread:$0]  %s1984, 2048, %s1982, %s1970, 64, 64, 4
        $region36: #{tpu_custom_call.1} parent=31 // pred_fallthru
          _
      $region32: #{tpu_custom_call.1} parent=5 // pred_fallthru
        _
      %p1990 = scmp.le.s32.totalorder 2, %s12
      // Predicated region
      $region37: #{tpu_custom_call.1} parent=5 // pred_check
        %p1991 = pneg %p1990
      $region38: #{tpu_custom_call.1} parent=5 // pred_check_branch
        %1993 = sbr.rel (%p1991) target = $region40
      $region39: #{tpu_custom_call.1} parent=5 // pred_region
        %s1994 = ssub.s32 %s12, 2
        // Predicated region
        $region41: #{tpu_custom_call.1} parent=39 // pred_check
          %p1995 = pneg %p109
        $region42: #{tpu_custom_call.1} parent=39 // pred_check_branch
          %1997 = sbr.rel (%p1995) target = $region44
        $region43: #{tpu_custom_call.1} parent=39 // pred_region
          %s1998 = sand.u32 %s94, 1
          %s1999 = scalar_lea.sflag [#allocation4], %s1998
          %s2000 = sand.u32 %s94, 1
          %s2001 = smul.addr %s2000, 128
          %s2002 = scalar_lea.vmem [#allocation3], %s2001
          %2003 = dma.done %s1999, 2048
        $region44: #{tpu_custom_call.1} parent=39 // pred_fallthru
          _
      $region40: #{tpu_custom_call.1} parent=5 // pred_fallthru
        _
    $region6: #{tpu_custom_call.1} parent=1 // loop_footer
      %s16 = sadd.s32 1, %s12
    $region7: #{tpu_custom_call.1} parent=1 // loop_footer_branch
      %11 = sbr.rel target = $region3
    $region8: #{tpu_custom_call.1} parent=1 // loop_exit
      _
    %2004 = vsyncpa [#allocation4], 1
    %s2005 = scalar_lea.sflag [#allocation4], 1
    %2006 = vsyncpa %s2005, 1

</llo_original>
